<compile_context>
chip_gen: v6e
topology: v6e:2x2x1
jax: 0.10.0
libtpu: 0.0.40
codegen_flags: <defaults>
</compile_context>

<pallas_src>
import math

import numpy as np
import jax
import jax.numpy as jnp
from jax import lax
from jax.experimental import pallas as pl
from jax.experimental.pallas import tpu as pltpu


# ---------------------------------------------------------------------------
# Pallas kernel: tiled Linear  y = x @ w + b  with f32 accumulation on the MXU.
# Grid = (M_tiles, K_tiles); K (the reduction) is the last, "arbitrary" axis.
# The output BlockSpec ignores the K index, so o_ref (f32) stays resident in
# VMEM across the whole reduction and is the accumulator itself: bias folded
# into the k==0 init, dot accumulated straight in, no scratch / finalize.
# ---------------------------------------------------------------------------
def _proj_kernel(x_ref, w_ref, b_ref, o_ref):
    @pl.when(pl.program_id(1) == 0)
    def _init():
        o_ref[...] = jnp.broadcast_to(b_ref[...], o_ref.shape)

    o_ref[...] += jnp.dot(x_ref[...], w_ref[...],
                          preferred_element_type=jnp.float32)


def _pick_tile_k(k, *, cap=2048, block_k=None):
    if block_k is not None:
        block_k = int(block_k)
        assert k % block_k == 0, "block_k must divide K exactly"
        assert block_k == k or block_k % 128 == 0, \
            "block_k must be a multiple of 128 (or the full K)"
        return block_k
    if k <= cap:
        return k                          # single K step; block == full K dim
    for cand in (2048, 1024, 512, 256, 128):
        if k % cand == 0:
            return cand
    # Large K with no 128-multiple divisor (e.g. K = 7200 at the module's
    # production sizes): take the whole reduction in one block (legal: the
    # block equals the full K dim) and let the VMEM-aware TM picker keep the
    # footprint inside the budget (v7x has only 64 MiB physical VMEM).
    return k


def _pick_tile_m(m, tk, x_itemsize, w_itemsize, e, *,
                 cap=512, vmem_budget=40 * 1024 * 1024):
    """Pick TM.

    Prefers exact divisors of M (so the wrapper never rewrites the activation
    for a row remainder) and an even number of M steps (so the 'parallel'
    axis splits evenly over v7x's two TensorCores).  cap=512 keeps >=2 M steps
    at moderate M; on single-TC v6e/v5e a 1024 cap is worth only ~1%
    (85%->86% of HBM roofline), so the v7x-safe default is kept.
    """
    # VMEM-driven bound on TM -- guards the "TK = full K" fallback.
    fixed = 2 * tk * e * w_itemsize + 2 * e * 4         # weight + bias (dbl buf)
    per_row = 2 * tk * x_itemsize + 2 * e * 4           # x (dbl buf) + f32 out
    fit = max(8, int((vmem_budget - fixed) // per_row) // 8 * 8)
    cap = max(8, min(cap, fit))
    if m <= cap:
        return m                                        # block == full M dim
    divs = [d for d in range(8, cap + 1, 8) if m % d == 0]
    best = max(divs) if divs else 0
    if best >= 128:
        even = [d for d in divs if (m // d) % 2 == 0]
        if even and 2 * max(even) >= best:              # v7x megacore balance
            return max(even)
        return best
    # No decent divisor: fall back to a zero-padded row remainder (rare).
    return cap


def patch_linear(x2d, w_ke, b2d, *, block_m=None, block_k=None, tm_cap=512):
    """(M, K) @ (K, E) + (1, E) -> (M, E) float32, tiled Pallas matmul."""
    m, k = x2d.shape
    k2, e = w_ke.shape
    assert k == k2, (k, k2)

    tk = _pick_tile_k(k, block_k=block_k)

    if block_m is not None:
        tm = min(int(block_m), m)
        if tm < m and tm % 8:
            tm = min(m, (tm + 7) // 8 * 8)              # (8,128) layout rule
    else:
        tm = _pick_tile_m(m, tk,
                          jnp.dtype(x2d.dtype).itemsize,
                          jnp.dtype(w_ke.dtype).itemsize,
                          e, cap=tm_cap)

    # Row remainder: only pads when no decent divisor exists / user forced TM.
    m_pad = pl.cdiv(m, tm) * tm
    if m_pad != m:
        # TODO(synk): rare path -- costs one extra HBM pass over x2d.
        x2d = jnp.pad(x2d, ((0, m_pad - m), (0, 0)))

    grid = (m_pad // tm, k // tk)

    out = pl.pallas_call(
        _proj_kernel,
        out_shape=jax.ShapeDtypeStruct((m_pad, e), jnp.float32),
        grid_spec=pltpu.PrefetchScalarGridSpec(
            num_scalar_prefetch=0,
            grid=grid,
            in_specs=[
                pl.BlockSpec((tm, tk), lambda i, j: (i, j)),
                # Weight/bias index_maps ignore the M index -> blocks stay
                # resident across M steps when the K index does not change.
                pl.BlockSpec((tk, e), lambda i, j: (j, 0)),
                pl.BlockSpec((1, e), lambda i, j: (0, 0)),
            ],
            out_specs=pl.BlockSpec((tm, e), lambda i, j: (i, 0)),
        ),
        compiler_params=pltpu.CompilerParams(
            dimension_semantics=("parallel", "arbitrary"),
            vmem_limit_bytes=64 * 1024 * 1024,
        ),
    )(x2d, w_ke, b2d)

    if m_pad != m:
        out = out[:m]
    return out


class PatchEmbed3D:
    """JAX/Pallas port of the PyTorch PatchEmbed3D module."""

    def __init__(self, img_size=(15, 15, 15), patch_size=(4, 4, 4), in_chans=4,
                 embed_dim=32, num_frames=8, tubelet_size=2,
                 compute_dtype=jnp.bfloat16, block_m=None, block_k=None,
                 key=jax.random.PRNGKey(0)):
        self.img_size = tuple(img_size)
        self.patch_size = tuple(patch_size)
        self.tubelet = tubelet_size
        self.in_chans = in_chans
        self.embed_dim = embed_dim
        self.grid_size = tuple(
            math.ceil(s / p) * p for s, p in zip(self.img_size, self.patch_size)
        )
        nt = num_frames // tubelet_size
        nx, ny, nz = (g // p for g, p in zip(self.grid_size, self.patch_size))
        self.num_patches = nt * nx * ny * nz
        vox_per_patch = tubelet_size * math.prod(self.patch_size)
        in_features = in_chans * vox_per_patch

        # Deterministic nn.Linear-style init (uniform +- 1/sqrt(fan_in)).
        # self.weight keeps the torch layout/order: (E, K) with K flattened as
        # (tt, px, py, pz, c) -- exactly what the reference forward uses.
        k1, k2 = jax.random.split(key)
        bound = 1.0 / math.sqrt(in_features)
        self.weight = jax.random.uniform(
            k1, (embed_dim, in_features), jnp.float32, -bound, bound)
        self.bias = jax.random.uniform(
            k2, (embed_dim,), jnp.float32, -bound, bound)

        # The kernel-side activation flattens K as (c, tt, px, py, pz) (the
        # transpose-friendly order); permute the pre-transposed (K, E) weight
        # rows ONCE here so x2d_new @ w_ke == x2d_old @ weight.T exactly.
        perm = np.arange(in_features).reshape(
            tubelet_size, *self.patch_size, in_chans)
        perm = perm.transpose(4, 0, 1, 2, 3).reshape(-1)   # perm[k_new] = k_old
        self.compute_dtype = compute_dtype
        self.w_ke = self.weight.T[perm].astype(compute_dtype)        # (K, E)
        self.b2d = self.bias.reshape(1, embed_dim).astype(jnp.float32)

        self.block_m = block_m
        self.block_k = block_k

    def __call__(self, x):
        B, C, T, X, Y, Z = x.shape
        tt, px, py, pz = (self.tubelet, *self.patch_size)
        pad_x, pad_y, pad_z = (g - s for g, s in zip(self.grid_size, (X, Y, Z)))

        # Cast once, up front: every materialised copy below then moves half
        # the HBM bytes and the kernel reads bf16 (f32 path: no-op cast).
        x = x.astype(self.compute_dtype)

        # --- op-for-op reproduction of the torch forward (the permute ->
        #     view -> replicate-pad -> view round trip is semantically load-
        #     bearing; see header note) ---
        x = jnp.transpose(x, (0, 1, 3, 4, 5, 2))       # (B,C,X,Y,Z,T)
        x = x.reshape(B, C * T, X, Y, Z)               # torch .view() reinterpret
        if pad_x or pad_y or pad_z:
            x = jnp.pad(
                x, ((0, 0), (0, 0), (0, pad_x), (0, pad_y), (0, pad_z)),
                mode="edge")                           # F.pad(mode='replicate')
        Xp, Yp, Zp = X + pad_x, Y + pad_y, Z + pad_z
        x = x.reshape(B, C, T, Xp, Yp, Zp)             # torch .view() reinterpret

        nt, nx, ny, nz = T // tt, Xp // px, Yp // py, Zp // pz
        # Transpose-friendly rearrange:
        #   'b c (t tt) (x px) (y py) (z pz) -> b (t x y z) (c tt px py pz)'
        # (innermost output dim comes from contiguous pz runs; the weight rows
        #  were permuted in __init__ to match this K order exactly).
        x = x.reshape(B, C, nt, tt, nx, px, ny, py, nz, pz)
        x = jnp.transpose(x, (0, 2, 4, 6, 8, 1, 3, 5, 7, 9))
        N = nt * nx * ny * nz
        K = C * tt * px * py * pz
        x2d = x.reshape(B * N, K)

        # --- hot path: Linear(K -> embed_dim) on the MXU ---
        out2d = patch_linear(x2d, self.w_ke, self.b2d,
                             block_m=self.block_m, block_k=self.block_k)
        return out2d.reshape(B, N, self.embed_dim), (pad_x, pad_y, pad_z)


def reference_forward(module, x):
    """Pure-JAX f32 reference reproducing the torch forward exactly
    (original (tt,px,py,pz,c) K order, original (E,K) weight)."""
    B, C, T, X, Y, Z = x.shape
    tt, px, py, pz = (module.tubelet, *module.patch_size)
    pad_x, pad_y, pad_z = (g - s for g, s in zip(module.grid_size, (X, Y, Z)))
    xr = jnp.transpose(x.astype(jnp.float32), (0, 1, 3, 4, 5, 2))
    xr = xr.reshape(B, C * T, X, Y, Z)
    if pad_x or pad_y or pad_z:
        xr = jnp.pad(xr, ((0, 0), (0, 0), (0, pad_x), (0, pad_y), (0, pad_z)),
                     mode="edge")
    Xp, Yp, Zp = X + pad_x, Y + pad_y, Z + pad_z
    xr = xr.reshape(B, C, T, Xp, Yp, Zp)
    nt, nx, ny, nz = T // tt, Xp // px, Yp // py, Zp // pz
    xr = xr.reshape(B, C, nt, tt, nx, px, ny, py, nz, pz)
    xr = jnp.transpose(xr, (0, 2, 4, 6, 8, 3, 5, 7, 9, 1))
    xr = xr.reshape(B, nt * nx * ny * nz, -1)
    return jnp.einsum("bnk,ek->bne", xr, module.weight,
                      precision=lax.Precision.HIGHEST) + module.bias


if __name__ == "__main__":
    key = jax.random.PRNGKey(0)
    k_param, k_x = jax.random.split(key)

    # Small but representative: spatial 15x15x15 pads to 16x16x16 (replicate
    # path runs), 8 frames / tubelet 2, B=4 -> M = B*N = 1024 rows, K = 512.
    img_size, patch_size = (15, 15, 15), (4, 4, 4)
    B, C, T, E = 4, 4, 8, 32
    x = jax.random.normal(k_x, (B, C, T, *img_size), jnp.float32)

    # --- primary run: bf16 MXU inputs, auto tiles (TM=512 divisor of M ->
    #     2 even M steps, single resident K/weight block, no remainder pad) ---
    mod_bf16 = PatchEmbed3D(img_size, patch_size, in_chans=C, embed_dim=E,
                            num_frames=T, tubelet_size=2,
                            compute_dtype=jnp.bfloat16, key=k_param)
    out, pads = jax.jit(lambda v: mod_bf16(v))(x)
    out = jax.block_until_ready(out)
    assert out.shape == (B, mod_bf16.num_patches, E), out.shape
    assert tuple(int(p) for p in pads) == (1, 1, 1)
    ref = jax.block_until_ready(reference_forward(mod_bf16, x))
    np.testing.assert_allclose(np.asarray(out, np.float32), np.asarray(ref),
                               rtol=2e-2, atol=2e-2)   # bf16 inputs, f32 accum

    # --- secondary run: f32 path with forced small tiles.  Exercises the
    #     multi-step K accumulation directly into o_ref (4 K tiles), multiple
    #     M tiles and the M-remainder zero-pad fallback (M=768, TM=512). ------
    x3 = x[:3]
    mod_f32 = PatchEmbed3D(img_size, patch_size, in_chans=C, embed_dim=E,
                           num_frames=T, tubelet_size=2,
                           compute_dtype=jnp.float32,
                           block_m=512, block_k=128, key=k_param)
    out32, _ = jax.jit(lambda v: mod_f32(v))(x3)
    out32 = jax.block_until_ready(out32)
    ref32 = jax.block_until_ready(reference_forward(mod_f32, x3))
    np.testing.assert_allclose(np.asarray(out32), np.asarray(ref32),
                               rtol=2e-3, atol=2e-3)

    print("KERNEL_OK")
</pallas_src>

<mosaic_0001>
module attributes {stable_mosaic.version = 11 : i64} {
  func.func @_proj_kernel(%arg0: i32, %arg1: i32, %arg2: memref<512x512xbf16, #tpu.memory_space<vmem>>, %arg3: memref<512x32xbf16, #tpu.memory_space<vmem>>, %arg4: memref<1x32xf32, #tpu.memory_space<vmem>>, %arg5: memref<512x32xf32, #tpu.memory_space<vmem>>) attributes {dimension_semantics = [#tpu.dimension_semantics<parallel>, #tpu.dimension_semantics<arbitrary>], iteration_bounds = array<i64: 2, 1>, scalar_prefetch = 0 : i64, scratch_operands = 0 : i64, tpu.core_type = #tpu.core_type<tc>, window_params = [{transform_indices = @transform_0, window_bounds = array<i64: 512, 512>}, {transform_indices = @transform_1, window_bounds = array<i64: 512, 32>}, {pipeline_mode = #tpu.pipeline_mode<synchronous>, transform_indices = @transform_2, window_bounds = array<i64: 1, 32>}, {transform_indices = @transform_3, window_bounds = array<i64: 512, 32>}]} {
    %c0_i32 = arith.constant 0 : i32
    %0 = arith.cmpi eq, %arg1, %c0_i32 : i32
    %1 = arith.extui %0 : i1 to i32
    %c0_i32_0 = arith.constant 0 : i32
    %2 = arith.cmpi ne, %1, %c0_i32_0 : i32
    scf.if %2 {
      %c0_8 = arith.constant 0 : index
      %c0_9 = arith.constant 0 : index
      %9 = vector.load %arg4[%c0_8, %c0_9] : memref<1x32xf32, #tpu.memory_space<vmem>>, vector<1x32xf32>
      %10 = vector.shape_cast %9 : vector<1x32xf32> to vector<1x32xf32>
      %11 = vector.broadcast %10 : vector<1x32xf32> to vector<512x32xf32>
      %c0_10 = arith.constant 0 : index
      %c0_11 = arith.constant 0 : index
      %12 = vector.load %arg5[%c0_10, %c0_11] : memref<512x32xf32, #tpu.memory_space<vmem>>, vector<512x32xf32>
      tpu.vector_store %arg5[%c0_10, %c0_11], %11 {strides = array<i32>} : memref<512x32xf32, #tpu.memory_space<vmem>>, vector<512x32xf32>,
    } else {
    }
    %c0 = arith.constant 0 : index
    %c0_1 = arith.constant 0 : index
    %3 = vector.load %arg5[%c0, %c0_1] : memref<512x32xf32, #tpu.memory_space<vmem>>, vector<512x32xf32>
    %c0_2 = arith.constant 0 : index
    %c0_3 = arith.constant 0 : index
    %4 = vector.load %arg2[%c0_2, %c0_3] : memref<512x512xbf16, #tpu.memory_space<vmem>>, vector<512x512xbf16>
    %c0_4 = arith.constant 0 : index
    %c0_5 = arith.constant 0 : index
    %5 = vector.load %arg3[%c0_4, %c0_5] : memref<512x32xbf16, #tpu.memory_space<vmem>>, vector<512x32xbf16>
    %cst = arith.constant dense<0.000000e+00> : vector<512x32xf32>
    %6 = tpu.matmul %4, %5, %cst {dimension_numbers = #tpu.dot_dimension_numbers<[1], [0], [0], [1], [0, 0, 1, 1], [], []>} : vector<512x512xbf16>, vector<512x32xbf16>, vector<512x32xf32> -> vector<512x32xf32>
    %7 = arith.addf %3, %6 : vector<512x32xf32>
    %c0_6 = arith.constant 0 : index
    %c0_7 = arith.constant 0 : index
    %8 = vector.load %arg5[%c0_6, %c0_7] : memref<512x32xf32, #tpu.memory_space<vmem>>, vector<512x32xf32>
    tpu.vector_store %arg5[%c0_6, %c0_7], %7 {strides = array<i32>} : memref<512x32xf32, #tpu.memory_space<vmem>>, vector<512x32xf32>,
    return
  }
  func.func @transform_0(%arg0: i32, %arg1: i32) -> (i32, i32) {
    %c0_i32 = arith.constant 0 : i32
    return %arg0, %arg1 : i32, i32
  }
  func.func @transform_1(%arg0: i32, %arg1: i32) -> (i32, i32) {
    %c0_i32 = arith.constant 0 : i32
    %c0_i32_0 = arith.constant 0 : i32
    return %arg1, %c0_i32 : i32, i32
  }
  func.func @transform_2(%arg0: i32, %arg1: i32) -> (i32, i32) {
    %c0_i32 = arith.constant 0 : i32
    %c0_i32_0 = arith.constant 0 : i32
    %c0_i32_1 = arith.constant 0 : i32
    return %c0_i32, %c0_i32_0 : i32, i32
  }
  func.func @transform_3(%arg0: i32, %arg1: i32) -> (i32, i32) {
    %c0_i32 = arith.constant 0 : i32
    %c0_i32_0 = arith.constant 0 : i32
    return %arg0, %c0_i32 : i32, i32
  }
}

</mosaic_0001>

<llo_original>
// kernel: _lambda_.1
$region0: #{_lambda_.1}
  #allocation0 [shape = 'u32[]', space=smem, size = 0x4, offset = 0x4, fixed_abs, tag = 'smem constant byte address 0x4 - core index']
  #allocation1 [shape = 'u32[144,128]{1,0:T(1,128)}', space=vmem, size = 0x12000, scoped, tag = 'internal scratch']
  %s0 = inlined_call_operand.vmem [shape: bf16[1024,512], index: 0, kind: input, shape index: {}]
  %s1 = inlined_call_operand.vmem [shape: bf16[512,32], index: 1, kind: input, shape index: {}]
  %s2 = inlined_call_operand.vmem [shape: f32[1,32], index: 2, kind: input, shape index: {}]
  %s3 = inlined_call_operand.vmem [shape: f32[1024,32], index: 3, kind: output, shape index: {}]
  %s4 = sld [smem:[#allocation0]]
  $region49: #{_lambda_.1} parent=0
    _
  %s6 = ssub.s32 1, %s4
  %s7 = scalar_select 0, %s6, %s4
  loop: start=0, step=1, limit=4
  $region2: #{_lambda_.1} parent=0 // loop_pre_header
    _
  $region3: #{_lambda_.1} parent=0 // loop_header
    %s9 = sphi 0, %s13
    %p10 = scmp.ge.s32.totalorder %s9, 4
    %s16 = sphi 0, %s28
    %s17 = sphi 0, %s24
    %s18 = sphi 0, %s16
    %s19 = sphi 0, %s17
    %s20 = sphi 0, %s18
    %s21 = sphi 0, %s19
    %s33 = sphi 0, %s35
    %s36 = sphi 0, %s33
    %s37 = sphi 0, %s36
    %s53 = sphi 0, %s37
    %s59 = sphi 0, %s61
    %s62 = sphi 0, %s59
    %s63 = sphi 0, %s62
    %s79 = sphi 0, %s63
    %s83 = sphi 0, %s83
    %s85 = sphi 0, %s83
    %s86 = sphi 0, %s85
    %s100 = sphi 0, %s86
    %s106 = sphi 0, %s108
    %s109 = sphi 0, %s106
    %s110 = sphi 0, %s109
    %s126 = sphi 0, %s110
  $region4: #{_lambda_.1} parent=0 // loop_header_branch
    %12 = sbr.rel (%p10) target = $region8
  $region5: #{_lambda_.1} parent=0 // loop_body
    %s14 = ssub.s32 %s9, 1
    %s15 = ssub.s32 %s9, 2
    %s22 = sadd.s32 1, %s17
    %p23 = scmp.ge.s32.totalorder %s22, 1
    %s24 = scalar_select %p23, 0, %s22
    %s25 = sadd.s32 1, %s16
    %s26 = scalar_select %p23, %s25, %s16
    %p27 = scmp.ge.s32.totalorder %s26, 2
    %s28 = scalar_select %p27, 0, %s26
    %s29 = ssub.s32 %s16, %s28
    %s30 = ssub.s32 %s17, %s24
    %s31 = sor.u32 %s29, %s30
    %p32 = scmp.eq.s32.totalorder %s31, 0
    %s34 = sadd.s32 %s33, 1
    %s35 = scalar_select %p32, %s33, %s34
    %p38 = pneg %p32
    %p39 = scmp.eq.s32.totalorder %s9, 1
    %p40 = por %p38, %p39
    %p41 = scmp.ne.s32.totalorder %s33, %s36
    %p42 = scmp.eq.s32.totalorder %s9, 0
    %p43 = por %p41, %p42
    %p44 = scmp.ne.s32.totalorder %s33, %s36
    %p45 = scmp.eq.s32.totalorder %s14, 1
    %p46 = por %p44, %p45
    %p47 = scmp.ne.s32.totalorder %s36, %s37
    %p48 = scmp.eq.s32.totalorder %s14, 0
    %p49 = por %p47, %p48
    %p50 = scmp.ne.s32.totalorder %s36, %s37
    %p51 = scmp.eq.s32.totalorder %s15, 1
    %p52 = por %p50, %p51
    %p54 = scmp.ne.s32.totalorder %s37, %s53
    %p55 = scmp.eq.s32.totalorder %s15, 0
    %p56 = por %p54, %p55
    %s57 = ssub.s32 %s17, %s24
    %p58 = scmp.eq.s32.totalorder %s57, 0
    %s60 = sadd.s32 %s59, 1
    %s61 = scalar_select %p58, %s59, %s60
    %p64 = pneg %p58
    %p65 = scmp.eq.s32.totalorder %s9, 1
    %p66 = por %p64, %p65
    %p67 = scmp.ne.s32.totalorder %s59, %s62
    %p68 = scmp.eq.s32.totalorder %s9, 0
    %p69 = por %p67, %p68
    %p70 = scmp.ne.s32.totalorder %s59, %s62
    %p71 = scmp.eq.s32.totalorder %s14, 1
    %p72 = por %p70, %p71
    %p73 = scmp.ne.s32.totalorder %s62, %s63
    %p74 = scmp.eq.s32.totalorder %s14, 0
    %p75 = por %p73, %p74
    %p76 = scmp.ne.s32.totalorder %s62, %s63
    %p77 = scmp.eq.s32.totalorder %s15, 1
    %p78 = por %p76, %p77
    %p80 = scmp.ne.s32.totalorder %s63, %s79
    %p81 = scmp.eq.s32.totalorder %s15, 0
    %p82 = por %p80, %p81
    %s84 = sadd.s32 %s83, 1
    %p87 = scmp.eq.s32.totalorder %s9, 1
    %p88 = scmp.ne.s32.totalorder %s83, %s85
    %p89 = scmp.eq.s32.totalorder %s9, 0
    %p90 = por %p88, %p89
    %p91 = scmp.ne.s32.totalorder %s83, %s85
    %p92 = scmp.eq.s32.totalorder %s14, 1
    %p93 = por %p91, %p92
    %p94 = scmp.ne.s32.totalorder %s85, %s86
    %p95 = scmp.eq.s32.totalorder %s14, 0
    %p96 = por %p94, %p95
    %p97 = scmp.ne.s32.totalorder %s85, %s86
    %p98 = scmp.eq.s32.totalorder %s15, 1
    %p99 = por %p97, %p98
    %p101 = scmp.ne.s32.totalorder %s86, %s100
    %p102 = scmp.eq.s32.totalorder %s15, 0
    %p103 = por %p101, %p102
    %s104 = ssub.s32 %s16, %s28
    %p105 = scmp.eq.s32.totalorder %s104, 0
    %s107 = sadd.s32 %s106, 1
    %s108 = scalar_select %p105, %s106, %s107
    %p111 = pneg %p105
    %p112 = scmp.eq.s32.totalorder %s9, 1
    %p113 = por %p111, %p112
    %p114 = scmp.ne.s32.totalorder %s106, %s109
    %p115 = scmp.eq.s32.totalorder %s9, 0
    %p116 = por %p114, %p115
    %p117 = scmp.ne.s32.totalorder %s106, %s109
    %p118 = scmp.eq.s32.totalorder %s14, 1
    %p119 = por %p117, %p118
    %p120 = scmp.ne.s32.totalorder %s109, %s110
    %p121 = scmp.eq.s32.totalorder %s14, 0
    %p122 = por %p120, %p121
    %p123 = scmp.ne.s32.totalorder %s109, %s110
    %p124 = scmp.eq.s32.totalorder %s15, 1
    %p125 = por %p123, %p124
    %p127 = scmp.ne.s32.totalorder %s110, %s126
    %p128 = scmp.eq.s32.totalorder %s15, 0
    %p129 = por %p127, %p128
    %p130 = scmp.le.s32.totalorder 1, %s9
    %p131 = scmp.lt.s32.totalorder %s9, 3
    %p132 = pnand %p130, %p131
    %p133 = pneg %p132
    // Predicated region
    $region9: #{_lambda_.1} parent=5 // pred_check
      _
    $region10: #{_lambda_.1} parent=5 // pred_check_branch
      %135 = sbr.rel (%p132) target = $region12
    $region11: #{_lambda_.1} parent=5 // pred_region
      %s136 = ssub.s32 %s9, 1
      // Predicated region
      $region13: #{_lambda_.1} parent=11 // pred_check
        %p137 = pneg %p75
      $region14: #{_lambda_.1} parent=11 // pred_check_branch
        %139 = sbr.rel (%p137) target = $region16
      $region15: #{_lambda_.1} parent=11 // pred_region
        %s140 = smul.u32 64, %s19
        %p141 = scmp.lt.s32.totalorder %s140, 63
        %s142 = scalar_select %p141, %s140, 63
        %s143 = smul.addr %s142, 4
        %s144 = scalar_lea.vmem %s1, %s143
        %s145 = smul.u32 64, %s19
      $region16: #{_lambda_.1} parent=11 // pred_fallthru
        _
      // Predicated region
      $region17: #{_lambda_.1} parent=11 // pred_check
        %p146 = pneg %p96
      $region18: #{_lambda_.1} parent=11 // pred_check_branch
        %148 = sbr.rel (%p146) target = $region20
      $region19: #{_lambda_.1} parent=11 // pred_region
        _
      $region20: #{_lambda_.1} parent=11 // pred_fallthru
        _
    $region12: #{_lambda_.1} parent=5 // pred_fallthru
      _
    %p149 = scmp.lt.s32.totalorder %s9, 2
    // Predicated region
    $region21: #{_lambda_.1} parent=5 // pred_check
      %p150 = pneg %p149
    $region22: #{_lambda_.1} parent=5 // pred_check_branch
      %152 = sbr.rel (%p150) target = $region24
    $region23: #{_lambda_.1} parent=5 // pred_region
      // Predicated region
      $region25: #{_lambda_.1} parent=23 // pred_check
        %p153 = pneg %p43
      $region26: #{_lambda_.1} parent=23 // pred_check_branch
        %155 = sbr.rel (%p153) target = $region28
      $region27: #{_lambda_.1} parent=23 // pred_region
        %s156 = smul.u32 64, %s16
        %s157 = smul.u32 4, %s17
        %p158 = scmp.lt.s32.totalorder %s156, 127
        %s159 = scalar_select %p158, %s156, 127
        %p160 = scmp.lt.s32.totalorder %s157, 3
        %s161 = scalar_select %p160, %s157, 3
        %s162 = smul.addr %s159, 4
        %s163 = sadd.s32 %s161, %s162
        %s164 = smul.addr %s163, 4
        %s165 = scalar_lea.vmem %s0, %s164
        %s166 = smul.u32 64, %s16
        %s167 = smul.u32 4, %s17
      $region28: #{_lambda_.1} parent=23 // pred_fallthru
        _
    $region24: #{_lambda_.1} parent=5 // pred_fallthru
      _
    %p168 = scmp.le.s32.totalorder 1, %s9
    %p169 = scmp.lt.s32.totalorder %s9, 3
    %p170 = pnand %p168, %p169
    %p171 = pneg %p170
    // Predicated region
    $region29: #{_lambda_.1} parent=5 // pred_check
      _
    $region30: #{_lambda_.1} parent=5 // pred_check_branch
      %173 = sbr.rel (%p170) target = $region32
    $region31: #{_lambda_.1} parent=5 // pred_region
      %s174 = ssub.s32 %s9, 1
      %s175 = smul.u32 64, %s18
      %s176 = smul.u32 4, %s19
      %p177 = scmp.lt.s32.totalorder %s175, 127
      %s178 = scalar_select %p177, %s175, 127
      %p179 = scmp.lt.s32.totalorder %s176, 3
      %s180 = scalar_select %p179, %s176, 3
      %s181 = smul.addr %s178, 4
      %s182 = sadd.s32 %s180, %s181
      %s183 = smul.addr %s182, 4
      %s184 = scalar_lea.vmem %s0, %s183
      %p185 = pneg %p49
      %p186 = pneg %p46
      %s187 = smul.u32 64, %s19
      %p188 = scmp.lt.s32.totalorder %s187, 63
      %s189 = scalar_select %p188, %s187, 63
      %s190 = smul.addr %s189, 4
      %s191 = scalar_lea.vmem %s1, %s190
      %p192 = pneg %p75
      %p193 = pneg %p72
      %p194 = pneg %p96
      %p195 = pneg %p93
      %p196 = pneg %p122
      %p197 = pneg %p119
      %s198 = smul.u32 64, %s18
      %p199 = scmp.lt.s32.totalorder %s198, 127
      %s200 = scalar_select %p199, %s198, 127
      %s201 = smul.addr %s200, 8
      %s202 = scalar_lea.vmem %s3, %s201
      %s203 = smul.u32 64, %s18
      %s204 = smul.u32 4, %s19
      %p205 = scmp.lt.s32.totalorder %s203, 127
      %s206 = scalar_select %p205, %s203, 127
      %p207 = scmp.lt.s32.totalorder %s204, 3
      %s208 = scalar_select %p207, %s204, 3
      %s209 = smul.addr %s206, 4
      %s210 = sadd.s32 %s208, %s209
      %s211 = smul.addr %s210, 4
      %s212 = scalar_lea.vmem %s0, %s211
      %s213 = smul.u32 64, %s18
      %s214 = smul.u32 4, %s19
      %s215 = smul.u32 64, %s19
      %p216 = scmp.lt.s32.totalorder %s215, 63
      %s217 = scalar_select %p216, %s215, 63
      %s218 = smul.addr %s217, 4
      %s219 = scalar_lea.vmem %s1, %s218
      %s220 = smul.u32 64, %s19
      %s221 = smul.u32 64, %s18
      %p222 = scmp.lt.s32.totalorder %s221, 127
      %s223 = scalar_select %p222, %s221, 127
      %s224 = smul.addr %s223, 8
      %s225 = scalar_lea.vmem %s3, %s224
      %s226 = smul.u32 64, %s18
      %p228 = scmp.eq.s32.totalorder %s19, 0
      // Predicated region
      $region33: #{_lambda_.1} parent=31 // pred_check
        %p229 = pneg %p228
      $region34: #{_lambda_.1} parent=31 // pred_check_branch
        %231 = sbr.rel (%p229) target = $region36
      $region35: #{_lambda_.1} parent=31 // pred_region
        %v232 = vld [vmem:[%s2] sm:$0x1]
        %v234 = vlaneseq
        %v235 = vshrl.u32 %v234, 7
        %v236 = vsub.s32 0, %v235
        %v237 = vrot.slane %v232, %v236
        %vm239 = vcmask 261120
        %240 = vst.msk [vmem:[%s225] sm:$0xff] %vm239, %v237
        %241 = vst.msk [vmem:[%s225 + $0x8] sm:$0xff] %vm239, %v237
        %242 = vst.msk [vmem:[%s225 + $0x10] sm:$0xff] %vm239, %v237
        %243 = vst.msk [vmem:[%s225 + $0x18] sm:$0xff] %vm239, %v237
        %244 = vst.msk [vmem:[%s225 + $0x20] sm:$0xff] %vm239, %v237
        %245 = vst.msk [vmem:[%s225 + $0x28] sm:$0xff] %vm239, %v237
        %246 = vst.msk [vmem:[%s225 + $0x30] sm:$0xff] %vm239, %v237
        %247 = vst.msk [vmem:[%s225 + $0x38] sm:$0xff] %vm239, %v237
        %248 = vst.msk [vmem:[%s225 + $0x40] sm:$0xff] %vm239, %v237
        %249 = vst.msk [vmem:[%s225 + $0x48] sm:$0xff] %vm239, %v237
        %250 = vst.msk [vmem:[%s225 + $0x50] sm:$0xff] %vm239, %v237
        %251 = vst.msk [vmem:[%s225 + $0x58] sm:$0xff] %vm239, %v237
        %252 = vst.msk [vmem:[%s225 + $0x60] sm:$0xff] %vm239, %v237
        %253 = vst.msk [vmem:[%s225 + $0x68] sm:$0xff] %vm239, %v237
        %254 = vst.msk [vmem:[%s225 + $0x70] sm:$0xff] %vm239, %v237
        %255 = vst.msk [vmem:[%s225 + $0x78] sm:$0xff] %vm239, %v237
        %256 = vst.msk [vmem:[%s225 + $0x80] sm:$0xff] %vm239, %v237
        %257 = vst.msk [vmem:[%s225 + $0x88] sm:$0xff] %vm239, %v237
        %258 = vst.msk [vmem:[%s225 + $0x90] sm:$0xff] %vm239, %v237
        %259 = vst.msk [vmem:[%s225 + $0x98] sm:$0xff] %vm239, %v237
        %260 = vst.msk [vmem:[%s225 + $0xa0] sm:$0xff] %vm239, %v237
        %261 = vst.msk [vmem:[%s225 + $0xa8] sm:$0xff] %vm239, %v237
        %262 = vst.msk [vmem:[%s225 + $0xb0] sm:$0xff] %vm239, %v237
        %263 = vst.msk [vmem:[%s225 + $0xb8] sm:$0xff] %vm239, %v237
        %264 = vst.msk [vmem:[%s225 + $0xc0] sm:$0xff] %vm239, %v237
        %265 = vst.msk [vmem:[%s225 + $0xc8] sm:$0xff] %vm239, %v237
        %266 = vst.msk [vmem:[%s225 + $0xd0] sm:$0xff] %vm239, %v237
        %267 = vst.msk [vmem:[%s225 + $0xd8] sm:$0xff] %vm239, %v237
        %268 = vst.msk [vmem:[%s225 + $0xe0] sm:$0xff] %vm239, %v237
        %269 = vst.msk [vmem:[%s225 + $0xe8] sm:$0xff] %vm239, %v237
        %270 = vst.msk [vmem:[%s225 + $0xf0] sm:$0xff] %vm239, %v237
        %271 = vst.msk [vmem:[%s225 + $0xf8] sm:$0xff] %vm239, %v237
        %272 = vst.msk [vmem:[%s225 + $0x100] sm:$0xff] %vm239, %v237
        %273 = vst.msk [vmem:[%s225 + $0x108] sm:$0xff] %vm239, %v237
        %274 = vst.msk [vmem:[%s225 + $0x110] sm:$0xff] %vm239, %v237
        %275 = vst.msk [vmem:[%s225 + $0x118] sm:$0xff] %vm239, %v237
        %276 = vst.msk [vmem:[%s225 + $0x120] sm:$0xff] %vm239, %v237
        %277 = vst.msk [vmem:[%s225 + $0x128] sm:$0xff] %vm239, %v237
        %278 = vst.msk [vmem:[%s225 + $0x130] sm:$0xff] %vm239, %v237
        %279 = vst.msk [vmem:[%s225 + $0x138] sm:$0xff] %vm239, %v237
        %280 = vst.msk [vmem:[%s225 + $0x140] sm:$0xff] %vm239, %v237
        %281 = vst.msk [vmem:[%s225 + $0x148] sm:$0xff] %vm239, %v237
        %282 = vst.msk [vmem:[%s225 + $0x150] sm:$0xff] %vm239, %v237
        %283 = vst.msk [vmem:[%s225 + $0x158] sm:$0xff] %vm239, %v237
        %284 = vst.msk [vmem:[%s225 + $0x160] sm:$0xff] %vm239, %v237
        %285 = vst.msk [vmem:[%s225 + $0x168] sm:$0xff] %vm239, %v237
        %286 = vst.msk [vmem:[%s225 + $0x170] sm:$0xff] %vm239, %v237
        %287 = vst.msk [vmem:[%s225 + $0x178] sm:$0xff] %vm239, %v237
        %288 = vst.msk [vmem:[%s225 + $0x180] sm:$0xff] %vm239, %v237
        %289 = vst.msk [vmem:[%s225 + $0x188] sm:$0xff] %vm239, %v237
        %290 = vst.msk [vmem:[%s225 + $0x190] sm:$0xff] %vm239, %v237
        %291 = vst.msk [vmem:[%s225 + $0x198] sm:$0xff] %vm239, %v237
        %292 = vst.msk [vmem:[%s225 + $0x1a0] sm:$0xff] %vm239, %v237
        %293 = vst.msk [vmem:[%s225 + $0x1a8] sm:$0xff] %vm239, %v237
        %294 = vst.msk [vmem:[%s225 + $0x1b0] sm:$0xff] %vm239, %v237
        %295 = vst.msk [vmem:[%s225 + $0x1b8] sm:$0xff] %vm239, %v237
        %296 = vst.msk [vmem:[%s225 + $0x1c0] sm:$0xff] %vm239, %v237
        %297 = vst.msk [vmem:[%s225 + $0x1c8] sm:$0xff] %vm239, %v237
        %298 = vst.msk [vmem:[%s225 + $0x1d0] sm:$0xff] %vm239, %v237
        %299 = vst.msk [vmem:[%s225 + $0x1d8] sm:$0xff] %vm239, %v237
        %300 = vst.msk [vmem:[%s225 + $0x1e0] sm:$0xff] %vm239, %v237
        %301 = vst.msk [vmem:[%s225 + $0x1e8] sm:$0xff] %vm239, %v237
        %302 = vst.msk [vmem:[%s225 + $0x1f0] sm:$0xff] %vm239, %v237
        %303 = vst.msk [vmem:[%s225 + $0x1f8] sm:$0xff] %vm239, %v237
      $region36: #{_lambda_.1} parent=31 // pred_fallthru
        _
      %v304 = vld [vmem:[%s225] sm:$0xff]
      %v305 = vld [vmem:[%s225 + $0x8] sm:$0xff]
      %v306 = vld [vmem:[%s225 + $0x10] sm:$0xff]
      %v307 = vld [vmem:[%s225 + $0x18] sm:$0xff]
      %v308 = vld [vmem:[%s225 + $0x20] sm:$0xff]
      %v309 = vld [vmem:[%s225 + $0x28] sm:$0xff]
      %v310 = vld [vmem:[%s225 + $0x30] sm:$0xff]
      %v311 = vld [vmem:[%s225 + $0x38] sm:$0xff]
      %v312 = vld [vmem:[%s225 + $0x40] sm:$0xff]
      %v313 = vld [vmem:[%s225 + $0x48] sm:$0xff]
      %v314 = vld [vmem:[%s225 + $0x50] sm:$0xff]
      %v315 = vld [vmem:[%s225 + $0x58] sm:$0xff]
      %v316 = vld [vmem:[%s225 + $0x60] sm:$0xff]
      %v317 = vld [vmem:[%s225 + $0x68] sm:$0xff]
      %v318 = vld [vmem:[%s225 + $0x70] sm:$0xff]
      %v319 = vld [vmem:[%s225 + $0x78] sm:$0xff]
      %v320 = vld [vmem:[%s225 + $0x80] sm:$0xff]
      %v321 = vld [vmem:[%s225 + $0x88] sm:$0xff]
      %v322 = vld [vmem:[%s225 + $0x90] sm:$0xff]
      %v323 = vld [vmem:[%s225 + $0x98] sm:$0xff]
      %v324 = vld [vmem:[%s225 + $0xa0] sm:$0xff]
      %v325 = vld [vmem:[%s225 + $0xa8] sm:$0xff]
      %v326 = vld [vmem:[%s225 + $0xb0] sm:$0xff]
      %v327 = vld [vmem:[%s225 + $0xb8] sm:$0xff]
      %v328 = vld [vmem:[%s225 + $0xc0] sm:$0xff]
      %v329 = vld [vmem:[%s225 + $0xc8] sm:$0xff]
      %v330 = vld [vmem:[%s225 + $0xd0] sm:$0xff]
      %v331 = vld [vmem:[%s225 + $0xd8] sm:$0xff]
      %v332 = vld [vmem:[%s225 + $0xe0] sm:$0xff]
      %v333 = vld [vmem:[%s225 + $0xe8] sm:$0xff]
      %v334 = vld [vmem:[%s225 + $0xf0] sm:$0xff]
      %v335 = vld [vmem:[%s225 + $0xf8] sm:$0xff]
      %v336 = vld [vmem:[%s225 + $0x100] sm:$0xff]
      %v337 = vld [vmem:[%s225 + $0x108] sm:$0xff]
      %v338 = vld [vmem:[%s225 + $0x110] sm:$0xff]
      %v339 = vld [vmem:[%s225 + $0x118] sm:$0xff]
      %v340 = vld [vmem:[%s225 + $0x120] sm:$0xff]
      %v341 = vld [vmem:[%s225 + $0x128] sm:$0xff]
      %v342 = vld [vmem:[%s225 + $0x130] sm:$0xff]
      %v343 = vld [vmem:[%s225 + $0x138] sm:$0xff]
      %v344 = vld [vmem:[%s225 + $0x140] sm:$0xff]
      %v345 = vld [vmem:[%s225 + $0x148] sm:$0xff]
      %v346 = vld [vmem:[%s225 + $0x150] sm:$0xff]
      %v347 = vld [vmem:[%s225 + $0x158] sm:$0xff]
      %v348 = vld [vmem:[%s225 + $0x160] sm:$0xff]
      %v349 = vld [vmem:[%s225 + $0x168] sm:$0xff]
      %v350 = vld [vmem:[%s225 + $0x170] sm:$0xff]
      %v351 = vld [vmem:[%s225 + $0x178] sm:$0xff]
      %v352 = vld [vmem:[%s225 + $0x180] sm:$0xff]
      %v353 = vld [vmem:[%s225 + $0x188] sm:$0xff]
      %v354 = vld [vmem:[%s225 + $0x190] sm:$0xff]
      %v355 = vld [vmem:[%s225 + $0x198] sm:$0xff]
      %v356 = vld [vmem:[%s225 + $0x1a0] sm:$0xff]
      %v357 = vld [vmem:[%s225 + $0x1a8] sm:$0xff]
      %v358 = vld [vmem:[%s225 + $0x1b0] sm:$0xff]
      %v359 = vld [vmem:[%s225 + $0x1b8] sm:$0xff]
      %v360 = vld [vmem:[%s225 + $0x1c0] sm:$0xff]
      %v361 = vld [vmem:[%s225 + $0x1c8] sm:$0xff]
      %v362 = vld [vmem:[%s225 + $0x1d0] sm:$0xff]
      %v363 = vld [vmem:[%s225 + $0x1d8] sm:$0xff]
      %v364 = vld [vmem:[%s225 + $0x1e0] sm:$0xff]
      %v365 = vld [vmem:[%s225 + $0x1e8] sm:$0xff]
      %v366 = vld [vmem:[%s225 + $0x1f0] sm:$0xff]
      %v367 = vld [vmem:[%s225 + $0x1f8] sm:$0xff]
      %v368 = vld [vmem:[%s212] sm:$0xff]
      %v369 = vld [vmem:[%s212 + $0x8] sm:$0xff]
      %v370 = vld [vmem:[%s212 + $0x10] sm:$0xff]
      %v371 = vld [vmem:[%s212 + $0x18] sm:$0xff]
      %v372 = vld [vmem:[%s212 + $0x20] sm:$0xff]
      %v373 = vld [vmem:[%s212 + $0x28] sm:$0xff]
      %v374 = vld [vmem:[%s212 + $0x30] sm:$0xff]
      %v375 = vld [vmem:[%s212 + $0x38] sm:$0xff]
      %v376 = vld [vmem:[%s212 + $0x40] sm:$0xff]
      %v377 = vld [vmem:[%s212 + $0x48] sm:$0xff]
      %v378 = vld [vmem:[%s212 + $0x50] sm:$0xff]
      %v379 = vld [vmem:[%s212 + $0x58] sm:$0xff]
      %v380 = vld [vmem:[%s212 + $0x60] sm:$0xff]
      %v381 = vld [vmem:[%s212 + $0x68] sm:$0xff]
      %v382 = vld [vmem:[%s212 + $0x70] sm:$0xff]
      %v383 = vld [vmem:[%s212 + $0x78] sm:$0xff]
      %v384 = vld [vmem:[%s212 + $0x80] sm:$0xff]
      %v385 = vld [vmem:[%s212 + $0x88] sm:$0xff]
      %v386 = vld [vmem:[%s212 + $0x90] sm:$0xff]
      %v387 = vld [vmem:[%s212 + $0x98] sm:$0xff]
      %v388 = vld [vmem:[%s212 + $0xa0] sm:$0xff]
      %v389 = vld [vmem:[%s212 + $0xa8] sm:$0xff]
      %v390 = vld [vmem:[%s212 + $0xb0] sm:$0xff]
      %v391 = vld [vmem:[%s212 + $0xb8] sm:$0xff]
      %v392 = vld [vmem:[%s212 + $0xc0] sm:$0xff]
      %v393 = vld [vmem:[%s212 + $0xc8] sm:$0xff]
      %v394 = vld [vmem:[%s212 + $0xd0] sm:$0xff]
      %v395 = vld [vmem:[%s212 + $0xd8] sm:$0xff]
      %v396 = vld [vmem:[%s212 + $0xe0] sm:$0xff]
      %v397 = vld [vmem:[%s212 + $0xe8] sm:$0xff]
      %v398 = vld [vmem:[%s212 + $0xf0] sm:$0xff]
      %v399 = vld [vmem:[%s212 + $0xf8] sm:$0xff]
      %v400 = vld [vmem:[%s212 + $0x100] sm:$0xff]
      %v401 = vld [vmem:[%s212 + $0x108] sm:$0xff]
      %v402 = vld [vmem:[%s212 + $0x110] sm:$0xff]
      %v403 = vld [vmem:[%s212 + $0x118] sm:$0xff]
      %v404 = vld [vmem:[%s212 + $0x120] sm:$0xff]
      %v405 = vld [vmem:[%s212 + $0x128] sm:$0xff]
      %v406 = vld [vmem:[%s212 + $0x130] sm:$0xff]
      %v407 = vld [vmem:[%s212 + $0x138] sm:$0xff]
      %v408 = vld [vmem:[%s212 + $0x140] sm:$0xff]
      %v409 = vld [vmem:[%s212 + $0x148] sm:$0xff]
      %v410 = vld [vmem:[%s212 + $0x150] sm:$0xff]
      %v411 = vld [vmem:[%s212 + $0x158] sm:$0xff]
      %v412 = vld [vmem:[%s212 + $0x160] sm:$0xff]
      %v413 = vld [vmem:[%s212 + $0x168] sm:$0xff]
      %v414 = vld [vmem:[%s212 + $0x170] sm:$0xff]
      %v415 = vld [vmem:[%s212 + $0x178] sm:$0xff]
      %v416 = vld [vmem:[%s212 + $0x180] sm:$0xff]
      %v417 = vld [vmem:[%s212 + $0x188] sm:$0xff]
      %v418 = vld [vmem:[%s212 + $0x190] sm:$0xff]
      %v419 = vld [vmem:[%s212 + $0x198] sm:$0xff]
      %v420 = vld [vmem:[%s212 + $0x1a0] sm:$0xff]
      %v421 = vld [vmem:[%s212 + $0x1a8] sm:$0xff]
      %v422 = vld [vmem:[%s212 + $0x1b0] sm:$0xff]
      %v423 = vld [vmem:[%s212 + $0x1b8] sm:$0xff]
      %v424 = vld [vmem:[%s212 + $0x1c0] sm:$0xff]
      %v425 = vld [vmem:[%s212 + $0x1c8] sm:$0xff]
      %v426 = vld [vmem:[%s212 + $0x1d0] sm:$0xff]
      %v427 = vld [vmem:[%s212 + $0x1d8] sm:$0xff]
      %v428 = vld [vmem:[%s212 + $0x1e0] sm:$0xff]
      %v429 = vld [vmem:[%s212 + $0x1e8] sm:$0xff]
      %v430 = vld [vmem:[%s212 + $0x1f0] sm:$0xff]
      %v431 = vld [vmem:[%s212 + $0x1f8] sm:$0xff]
      %v432 = vld [vmem:[%s212 + $0x200] sm:$0xff]
      %v433 = vld [vmem:[%s212 + $0x208] sm:$0xff]
      %v434 = vld [vmem:[%s212 + $0x210] sm:$0xff]
      %v435 = vld [vmem:[%s212 + $0x218] sm:$0xff]
      %v436 = vld [vmem:[%s212 + $0x220] sm:$0xff]
      %v437 = vld [vmem:[%s212 + $0x228] sm:$0xff]
      %v438 = vld [vmem:[%s212 + $0x230] sm:$0xff]
      %v439 = vld [vmem:[%s212 + $0x238] sm:$0xff]
      %v440 = vld [vmem:[%s212 + $0x240] sm:$0xff]
      %v441 = vld [vmem:[%s212 + $0x248] sm:$0xff]
      %v442 = vld [vmem:[%s212 + $0x250] sm:$0xff]
      %v443 = vld [vmem:[%s212 + $0x258] sm:$0xff]
      %v444 = vld [vmem:[%s212 + $0x260] sm:$0xff]
      %v445 = vld [vmem:[%s212 + $0x268] sm:$0xff]
      %v446 = vld [vmem:[%s212 + $0x270] sm:$0xff]
      %v447 = vld [vmem:[%s212 + $0x278] sm:$0xff]
      %v448 = vld [vmem:[%s212 + $0x280] sm:$0xff]
      %v449 = vld [vmem:[%s212 + $0x288] sm:$0xff]
      %v450 = vld [vmem:[%s212 + $0x290] sm:$0xff]
      %v451 = vld [vmem:[%s212 + $0x298] sm:$0xff]
      %v452 = vld [vmem:[%s212 + $0x2a0] sm:$0xff]
      %v453 = vld [vmem:[%s212 + $0x2a8] sm:$0xff]
      %v454 = vld [vmem:[%s212 + $0x2b0] sm:$0xff]
      %v455 = vld [vmem:[%s212 + $0x2b8] sm:$0xff]
      %v456 = vld [vmem:[%s212 + $0x2c0] sm:$0xff]
      %v457 = vld [vmem:[%s212 + $0x2c8] sm:$0xff]
      %v458 = vld [vmem:[%s212 + $0x2d0] sm:$0xff]
      %v459 = vld [vmem:[%s212 + $0x2d8] sm:$0xff]
      %v460 = vld [vmem:[%s212 + $0x2e0] sm:$0xff]
      %v461 = vld [vmem:[%s212 + $0x2e8] sm:$0xff]
      %v462 = vld [vmem:[%s212 + $0x2f0] sm:$0xff]
      %v463 = vld [vmem:[%s212 + $0x2f8] sm:$0xff]
      %v464 = vld [vmem:[%s212 + $0x300] sm:$0xff]
      %v465 = vld [vmem:[%s212 + $0x308] sm:$0xff]
      %v466 = vld [vmem:[%s212 + $0x310] sm:$0xff]
      %v467 = vld [vmem:[%s212 + $0x318] sm:$0xff]
      %v468 = vld [vmem:[%s212 + $0x320] sm:$0xff]
      %v469 = vld [vmem:[%s212 + $0x328] sm:$0xff]
      %v470 = vld [vmem:[%s212 + $0x330] sm:$0xff]
      %v471 = vld [vmem:[%s212 + $0x338] sm:$0xff]
      %v472 = vld [vmem:[%s212 + $0x340] sm:$0xff]
      %v473 = vld [vmem:[%s212 + $0x348] sm:$0xff]
      %v474 = vld [vmem:[%s212 + $0x350] sm:$0xff]
      %v475 = vld [vmem:[%s212 + $0x358] sm:$0xff]
      %v476 = vld [vmem:[%s212 + $0x360] sm:$0xff]
      %v477 = vld [vmem:[%s212 + $0x368] sm:$0xff]
      %v478 = vld [vmem:[%s212 + $0x370] sm:$0xff]
      %v479 = vld [vmem:[%s212 + $0x378] sm:$0xff]
      %v480 = vld [vmem:[%s212 + $0x380] sm:$0xff]
      %v481 = vld [vmem:[%s212 + $0x388] sm:$0xff]
      %v482 = vld [vmem:[%s212 + $0x390] sm:$0xff]
      %v483 = vld [vmem:[%s212 + $0x398] sm:$0xff]
      %v484 = vld [vmem:[%s212 + $0x3a0] sm:$0xff]
      %v485 = vld [vmem:[%s212 + $0x3a8] sm:$0xff]
      %v486 = vld [vmem:[%s212 + $0x3b0] sm:$0xff]
      %v487 = vld [vmem:[%s212 + $0x3b8] sm:$0xff]
      %v488 = vld [vmem:[%s212 + $0x3c0] sm:$0xff]
      %v489 = vld [vmem:[%s212 + $0x3c8] sm:$0xff]
      %v490 = vld [vmem:[%s212 + $0x3d0] sm:$0xff]
      %v491 = vld [vmem:[%s212 + $0x3d8] sm:$0xff]
      %v492 = vld [vmem:[%s212 + $0x3e0] sm:$0xff]
      %v493 = vld [vmem:[%s212 + $0x3e8] sm:$0xff]
      %v494 = vld [vmem:[%s212 + $0x3f0] sm:$0xff]
      %v495 = vld [vmem:[%s212 + $0x3f8] sm:$0xff]
      %v496 = vld [vmem:[%s219] sm:$0xf]
      %v497 = vld [vmem:[%s219 + $0x4] sm:$0xf]
      %v498 = vld [vmem:[%s219 + $0x8] sm:$0xf]
      %v499 = vld [vmem:[%s219 + $0xc] sm:$0xf]
      %v500 = vld [vmem:[%s219 + $0x10] sm:$0xf]
      %v501 = vld [vmem:[%s219 + $0x14] sm:$0xf]
      %v502 = vld [vmem:[%s219 + $0x18] sm:$0xf]
      %v503 = vld [vmem:[%s219 + $0x1c] sm:$0xf]
      %v504 = vld [vmem:[%s219 + $0x20] sm:$0xf]
      %v505 = vld [vmem:[%s219 + $0x24] sm:$0xf]
      %v506 = vld [vmem:[%s219 + $0x28] sm:$0xf]
      %v507 = vld [vmem:[%s219 + $0x2c] sm:$0xf]
      %v508 = vld [vmem:[%s219 + $0x30] sm:$0xf]
      %v509 = vld [vmem:[%s219 + $0x34] sm:$0xf]
      %v510 = vld [vmem:[%s219 + $0x38] sm:$0xf]
      %v511 = vld [vmem:[%s219 + $0x3c] sm:$0xf]
      %v512 = vld [vmem:[%s219 + $0x40] sm:$0xf]
      %v513 = vld [vmem:[%s219 + $0x44] sm:$0xf]
      %v514 = vld [vmem:[%s219 + $0x48] sm:$0xf]
      %v515 = vld [vmem:[%s219 + $0x4c] sm:$0xf]
      %v516 = vld [vmem:[%s219 + $0x50] sm:$0xf]
      %v517 = vld [vmem:[%s219 + $0x54] sm:$0xf]
      %v518 = vld [vmem:[%s219 + $0x58] sm:$0xf]
      %v519 = vld [vmem:[%s219 + $0x5c] sm:$0xf]
      %v520 = vld [vmem:[%s219 + $0x60] sm:$0xf]
      %v521 = vld [vmem:[%s219 + $0x64] sm:$0xf]
      %v522 = vld [vmem:[%s219 + $0x68] sm:$0xf]
      %v523 = vld [vmem:[%s219 + $0x6c] sm:$0xf]
      %v524 = vld [vmem:[%s219 + $0x70] sm:$0xf]
      %v525 = vld [vmem:[%s219 + $0x74] sm:$0xf]
      %v526 = vld [vmem:[%s219 + $0x78] sm:$0xf]
      %v527 = vld [vmem:[%s219 + $0x7c] sm:$0xf]
      %v528 = vld [vmem:[%s219 + $0x80] sm:$0xf]
      %v529 = vld [vmem:[%s219 + $0x84] sm:$0xf]
      %v530 = vld [vmem:[%s219 + $0x88] sm:$0xf]
      %v531 = vld [vmem:[%s219 + $0x8c] sm:$0xf]
      %v532 = vld [vmem:[%s219 + $0x90] sm:$0xf]
      %v533 = vld [vmem:[%s219 + $0x94] sm:$0xf]
      %v534 = vld [vmem:[%s219 + $0x98] sm:$0xf]
      %v535 = vld [vmem:[%s219 + $0x9c] sm:$0xf]
      %v536 = vld [vmem:[%s219 + $0xa0] sm:$0xf]
      %v537 = vld [vmem:[%s219 + $0xa4] sm:$0xf]
      %v538 = vld [vmem:[%s219 + $0xa8] sm:$0xf]
      %v539 = vld [vmem:[%s219 + $0xac] sm:$0xf]
      %v540 = vld [vmem:[%s219 + $0xb0] sm:$0xf]
      %v541 = vld [vmem:[%s219 + $0xb4] sm:$0xf]
      %v542 = vld [vmem:[%s219 + $0xb8] sm:$0xf]
      %v543 = vld [vmem:[%s219 + $0xbc] sm:$0xf]
      %v544 = vld [vmem:[%s219 + $0xc0] sm:$0xf]
      %v545 = vld [vmem:[%s219 + $0xc4] sm:$0xf]
      %v546 = vld [vmem:[%s219 + $0xc8] sm:$0xf]
      %v547 = vld [vmem:[%s219 + $0xcc] sm:$0xf]
      %v548 = vld [vmem:[%s219 + $0xd0] sm:$0xf]
      %v549 = vld [vmem:[%s219 + $0xd4] sm:$0xf]
      %v550 = vld [vmem:[%s219 + $0xd8] sm:$0xf]
      %v551 = vld [vmem:[%s219 + $0xdc] sm:$0xf]
      %v552 = vld [vmem:[%s219 + $0xe0] sm:$0xf]
      %v553 = vld [vmem:[%s219 + $0xe4] sm:$0xf]
      %v554 = vld [vmem:[%s219 + $0xe8] sm:$0xf]
      %v555 = vld [vmem:[%s219 + $0xec] sm:$0xf]
      %v556 = vld [vmem:[%s219 + $0xf0] sm:$0xf]
      %v557 = vld [vmem:[%s219 + $0xf4] sm:$0xf]
      %v558 = vld [vmem:[%s219 + $0xf8] sm:$0xf]
      %v559 = vld [vmem:[%s219 + $0xfc] sm:$0xf]
      %v688 = vunpack.c.l.b16 %v368
      %v689 = vunpack.c.h.b16 %v368
      %v690 = vunpack.c.l.b16 %v369
      %v691 = vunpack.c.h.b16 %v369
      %v692 = vunpack.c.l.b16 %v370
      %v693 = vunpack.c.h.b16 %v370
      %v694 = vunpack.c.l.b16 %v371
      %v695 = vunpack.c.h.b16 %v371
      %v696 = vunpack.c.l.b16 %v372
      %v697 = vunpack.c.h.b16 %v372
      %v698 = vunpack.c.l.b16 %v373
      %v699 = vunpack.c.h.b16 %v373
      %v700 = vunpack.c.l.b16 %v374
      %v701 = vunpack.c.h.b16 %v374
      %v702 = vunpack.c.l.b16 %v375
      %v703 = vunpack.c.h.b16 %v375
      %v704 = vunpack.c.l.b16 %v376
      %v705 = vunpack.c.h.b16 %v376
      %v706 = vunpack.c.l.b16 %v377
      %v707 = vunpack.c.h.b16 %v377
      %v708 = vunpack.c.l.b16 %v378
      %v709 = vunpack.c.h.b16 %v378
      %v710 = vunpack.c.l.b16 %v379
      %v711 = vunpack.c.h.b16 %v379
      %v712 = vunpack.c.l.b16 %v380
      %v713 = vunpack.c.h.b16 %v380
      %v714 = vunpack.c.l.b16 %v381
      %v715 = vunpack.c.h.b16 %v381
      %v716 = vunpack.c.l.b16 %v382
      %v717 = vunpack.c.h.b16 %v382
      %v718 = vunpack.c.l.b16 %v383
      %v719 = vunpack.c.h.b16 %v383
      %v720 = vunpack.c.l.b16 %v384
      %v721 = vunpack.c.h.b16 %v384
      %v722 = vunpack.c.l.b16 %v385
      %v723 = vunpack.c.h.b16 %v385
      %v724 = vunpack.c.l.b16 %v386
      %v725 = vunpack.c.h.b16 %v386
      %v726 = vunpack.c.l.b16 %v387
      %v727 = vunpack.c.h.b16 %v387
      %v728 = vunpack.c.l.b16 %v388
      %v729 = vunpack.c.h.b16 %v388
      %v730 = vunpack.c.l.b16 %v389
      %v731 = vunpack.c.h.b16 %v389
      %v732 = vunpack.c.l.b16 %v390
      %v733 = vunpack.c.h.b16 %v390
      %v734 = vunpack.c.l.b16 %v391
      %v735 = vunpack.c.h.b16 %v391
      %v736 = vunpack.c.l.b16 %v392
      %v737 = vunpack.c.h.b16 %v392
      %v738 = vunpack.c.l.b16 %v393
      %v739 = vunpack.c.h.b16 %v393
      %v740 = vunpack.c.l.b16 %v394
      %v741 = vunpack.c.h.b16 %v394
      %v742 = vunpack.c.l.b16 %v395
      %v743 = vunpack.c.h.b16 %v395
      %v744 = vunpack.c.l.b16 %v396
      %v745 = vunpack.c.h.b16 %v396
      %v746 = vunpack.c.l.b16 %v397
      %v747 = vunpack.c.h.b16 %v397
      %v748 = vunpack.c.l.b16 %v398
      %v749 = vunpack.c.h.b16 %v398
      %v750 = vunpack.c.l.b16 %v399
      %v751 = vunpack.c.h.b16 %v399
      %v752 = vunpack.c.l.b16 %v400
      %v753 = vunpack.c.h.b16 %v400
      %v754 = vunpack.c.l.b16 %v401
      %v755 = vunpack.c.h.b16 %v401
      %v756 = vunpack.c.l.b16 %v402
      %v757 = vunpack.c.h.b16 %v402
      %v758 = vunpack.c.l.b16 %v403
      %v759 = vunpack.c.h.b16 %v403
      %v760 = vunpack.c.l.b16 %v404
      %v761 = vunpack.c.h.b16 %v404
      %v762 = vunpack.c.l.b16 %v405
      %v763 = vunpack.c.h.b16 %v405
      %v764 = vunpack.c.l.b16 %v406
      %v765 = vunpack.c.h.b16 %v406
      %v766 = vunpack.c.l.b16 %v407
      %v767 = vunpack.c.h.b16 %v407
      %v768 = vunpack.c.l.b16 %v408
      %v769 = vunpack.c.h.b16 %v408
      %v770 = vunpack.c.l.b16 %v409
      %v771 = vunpack.c.h.b16 %v409
      %v772 = vunpack.c.l.b16 %v410
      %v773 = vunpack.c.h.b16 %v410
      %v774 = vunpack.c.l.b16 %v411
      %v775 = vunpack.c.h.b16 %v411
      %v776 = vunpack.c.l.b16 %v412
      %v777 = vunpack.c.h.b16 %v412
      %v778 = vunpack.c.l.b16 %v413
      %v779 = vunpack.c.h.b16 %v413
      %v780 = vunpack.c.l.b16 %v414
      %v781 = vunpack.c.h.b16 %v414
      %v782 = vunpack.c.l.b16 %v415
      %v783 = vunpack.c.h.b16 %v415
      %v784 = vunpack.c.l.b16 %v416
      %v785 = vunpack.c.h.b16 %v416
      %v786 = vunpack.c.l.b16 %v417
      %v787 = vunpack.c.h.b16 %v417
      %v788 = vunpack.c.l.b16 %v418
      %v789 = vunpack.c.h.b16 %v418
      %v790 = vunpack.c.l.b16 %v419
      %v791 = vunpack.c.h.b16 %v419
      %v792 = vunpack.c.l.b16 %v420
      %v793 = vunpack.c.h.b16 %v420
      %v794 = vunpack.c.l.b16 %v421
      %v795 = vunpack.c.h.b16 %v421
      %v796 = vunpack.c.l.b16 %v422
      %v797 = vunpack.c.h.b16 %v422
      %v798 = vunpack.c.l.b16 %v423
      %v799 = vunpack.c.h.b16 %v423
      %v800 = vunpack.c.l.b16 %v424
      %v801 = vunpack.c.h.b16 %v424
      %v802 = vunpack.c.l.b16 %v425
      %v803 = vunpack.c.h.b16 %v425
      %v804 = vunpack.c.l.b16 %v426
      %v805 = vunpack.c.h.b16 %v426
      %v806 = vunpack.c.l.b16 %v427
      %v807 = vunpack.c.h.b16 %v427
      %v808 = vunpack.c.l.b16 %v428
      %v809 = vunpack.c.h.b16 %v428
      %v810 = vunpack.c.l.b16 %v429
      %v811 = vunpack.c.h.b16 %v429
      %v812 = vunpack.c.l.b16 %v430
      %v813 = vunpack.c.h.b16 %v430
      %v814 = vunpack.c.l.b16 %v431
      %v815 = vunpack.c.h.b16 %v431
      %v816 = vunpack.c.l.b16 %v432
      %v817 = vunpack.c.h.b16 %v432
      %v818 = vunpack.c.l.b16 %v433
      %v819 = vunpack.c.h.b16 %v433
      %v820 = vunpack.c.l.b16 %v434
      %v821 = vunpack.c.h.b16 %v434
      %v822 = vunpack.c.l.b16 %v435
      %v823 = vunpack.c.h.b16 %v435
      %v824 = vunpack.c.l.b16 %v436
      %v825 = vunpack.c.h.b16 %v436
      %v826 = vunpack.c.l.b16 %v437
      %v827 = vunpack.c.h.b16 %v437
      %v828 = vunpack.c.l.b16 %v438
      %v829 = vunpack.c.h.b16 %v438
      %v830 = vunpack.c.l.b16 %v439
      %v831 = vunpack.c.h.b16 %v439
      %v832 = vunpack.c.l.b16 %v440
      %v833 = vunpack.c.h.b16 %v440
      %v834 = vunpack.c.l.b16 %v441
      %v835 = vunpack.c.h.b16 %v441
      %v836 = vunpack.c.l.b16 %v442
      %v837 = vunpack.c.h.b16 %v442
      %v838 = vunpack.c.l.b16 %v443
      %v839 = vunpack.c.h.b16 %v443
      %v840 = vunpack.c.l.b16 %v444
      %v841 = vunpack.c.h.b16 %v444
      %v842 = vunpack.c.l.b16 %v445
      %v843 = vunpack.c.h.b16 %v445
      %v844 = vunpack.c.l.b16 %v446
      %v845 = vunpack.c.h.b16 %v446
      %v846 = vunpack.c.l.b16 %v447
      %v847 = vunpack.c.h.b16 %v447
      %v848 = vunpack.c.l.b16 %v448
      %v849 = vunpack.c.h.b16 %v448
      %v850 = vunpack.c.l.b16 %v449
      %v851 = vunpack.c.h.b16 %v449
      %v852 = vunpack.c.l.b16 %v450
      %v853 = vunpack.c.h.b16 %v450
      %v854 = vunpack.c.l.b16 %v451
      %v855 = vunpack.c.h.b16 %v451
      %v856 = vunpack.c.l.b16 %v452
      %v857 = vunpack.c.h.b16 %v452
      %v858 = vunpack.c.l.b16 %v453
      %v859 = vunpack.c.h.b16 %v453
      %v860 = vunpack.c.l.b16 %v454
      %v861 = vunpack.c.h.b16 %v454
      %v862 = vunpack.c.l.b16 %v455
      %v863 = vunpack.c.h.b16 %v455
      %v864 = vunpack.c.l.b16 %v456
      %v865 = vunpack.c.h.b16 %v456
      %v866 = vunpack.c.l.b16 %v457
      %v867 = vunpack.c.h.b16 %v457
      %v868 = vunpack.c.l.b16 %v458
      %v869 = vunpack.c.h.b16 %v458
      %v870 = vunpack.c.l.b16 %v459
      %v871 = vunpack.c.h.b16 %v459
      %v872 = vunpack.c.l.b16 %v460
      %v873 = vunpack.c.h.b16 %v460
      %v874 = vunpack.c.l.b16 %v461
      %v875 = vunpack.c.h.b16 %v461
      %v876 = vunpack.c.l.b16 %v462
      %v877 = vunpack.c.h.b16 %v462
      %v878 = vunpack.c.l.b16 %v463
      %v879 = vunpack.c.h.b16 %v463
      %v880 = vunpack.c.l.b16 %v464
      %v881 = vunpack.c.h.b16 %v464
      %v882 = vunpack.c.l.b16 %v465
      %v883 = vunpack.c.h.b16 %v465
      %v884 = vunpack.c.l.b16 %v466
      %v885 = vunpack.c.h.b16 %v466
      %v886 = vunpack.c.l.b16 %v467
      %v887 = vunpack.c.h.b16 %v467
      %v888 = vunpack.c.l.b16 %v468
      %v889 = vunpack.c.h.b16 %v468
      %v890 = vunpack.c.l.b16 %v469
      %v891 = vunpack.c.h.b16 %v469
      %v892 = vunpack.c.l.b16 %v470
      %v893 = vunpack.c.h.b16 %v470
      %v894 = vunpack.c.l.b16 %v471
      %v895 = vunpack.c.h.b16 %v471
      %v896 = vunpack.c.l.b16 %v472
      %v897 = vunpack.c.h.b16 %v472
      %v898 = vunpack.c.l.b16 %v473
      %v899 = vunpack.c.h.b16 %v473
      %v900 = vunpack.c.l.b16 %v474
      %v901 = vunpack.c.h.b16 %v474
      %v902 = vunpack.c.l.b16 %v475
      %v903 = vunpack.c.h.b16 %v475
      %v904 = vunpack.c.l.b16 %v476
      %v905 = vunpack.c.h.b16 %v476
      %v906 = vunpack.c.l.b16 %v477
      %v907 = vunpack.c.h.b16 %v477
      %v908 = vunpack.c.l.b16 %v478
      %v909 = vunpack.c.h.b16 %v478
      %v910 = vunpack.c.l.b16 %v479
      %v911 = vunpack.c.h.b16 %v479
      %v912 = vunpack.c.l.b16 %v480
      %v913 = vunpack.c.h.b16 %v480
      %v914 = vunpack.c.l.b16 %v481
      %v915 = vunpack.c.h.b16 %v481
      %v916 = vunpack.c.l.b16 %v482
      %v917 = vunpack.c.h.b16 %v482
      %v918 = vunpack.c.l.b16 %v483
      %v919 = vunpack.c.h.b16 %v483
      %v920 = vunpack.c.l.b16 %v484
      %v921 = vunpack.c.h.b16 %v484
      %v922 = vunpack.c.l.b16 %v485
      %v923 = vunpack.c.h.b16 %v485
      %v924 = vunpack.c.l.b16 %v486
      %v925 = vunpack.c.h.b16 %v486
      %v926 = vunpack.c.l.b16 %v487
      %v927 = vunpack.c.h.b16 %v487
      %v928 = vunpack.c.l.b16 %v488
      %v929 = vunpack.c.h.b16 %v488
      %v930 = vunpack.c.l.b16 %v489
      %v931 = vunpack.c.h.b16 %v489
      %v932 = vunpack.c.l.b16 %v490
      %v933 = vunpack.c.h.b16 %v490
      %v934 = vunpack.c.l.b16 %v491
      %v935 = vunpack.c.h.b16 %v491
      %v936 = vunpack.c.l.b16 %v492
      %v937 = vunpack.c.h.b16 %v492
      %v938 = vunpack.c.l.b16 %v493
      %v939 = vunpack.c.h.b16 %v493
      %v940 = vunpack.c.l.b16 %v494
      %v941 = vunpack.c.h.b16 %v494
      %v942 = vunpack.c.l.b16 %v495
      %v943 = vunpack.c.h.b16 %v495
      %v944 = vpack.c.b16 %v692, %v688
      %v945 = vpack.c.b16 %v693, %v689
      %v946 = vpack.c.b16 %v694, %v690
      %v947 = vpack.c.b16 %v695, %v691
      %v948 = vpack.c.b16 %v700, %v696
      %v949 = vpack.c.b16 %v701, %v697
      %v950 = vpack.c.b16 %v702, %v698
      %v951 = vpack.c.b16 %v703, %v699
      %v952 = vpack.c.b16 %v708, %v704
      %v953 = vpack.c.b16 %v709, %v705
      %v954 = vpack.c.b16 %v710, %v706
      %v955 = vpack.c.b16 %v711, %v707
      %v956 = vpack.c.b16 %v716, %v712
      %v957 = vpack.c.b16 %v717, %v713
      %v958 = vpack.c.b16 %v718, %v714
      %v959 = vpack.c.b16 %v719, %v715
      %v960 = vpack.c.b16 %v724, %v720
      %v961 = vpack.c.b16 %v725, %v721
      %v962 = vpack.c.b16 %v726, %v722
      %v963 = vpack.c.b16 %v727, %v723
      %v964 = vpack.c.b16 %v732, %v728
      %v965 = vpack.c.b16 %v733, %v729
      %v966 = vpack.c.b16 %v734, %v730
      %v967 = vpack.c.b16 %v735, %v731
      %v968 = vpack.c.b16 %v740, %v736
      %v969 = vpack.c.b16 %v741, %v737
      %v970 = vpack.c.b16 %v742, %v738
      %v971 = vpack.c.b16 %v743, %v739
      %v972 = vpack.c.b16 %v748, %v744
      %v973 = vpack.c.b16 %v749, %v745
      %v974 = vpack.c.b16 %v750, %v746
      %v975 = vpack.c.b16 %v751, %v747
      %v976 = vpack.c.b16 %v756, %v752
      %v977 = vpack.c.b16 %v757, %v753
      %v978 = vpack.c.b16 %v758, %v754
      %v979 = vpack.c.b16 %v759, %v755
      %v980 = vpack.c.b16 %v764, %v760
      %v981 = vpack.c.b16 %v765, %v761
      %v982 = vpack.c.b16 %v766, %v762
      %v983 = vpack.c.b16 %v767, %v763
      %v984 = vpack.c.b16 %v772, %v768
      %v985 = vpack.c.b16 %v773, %v769
      %v986 = vpack.c.b16 %v774, %v770
      %v987 = vpack.c.b16 %v775, %v771
      %v988 = vpack.c.b16 %v780, %v776
      %v989 = vpack.c.b16 %v781, %v777
      %v990 = vpack.c.b16 %v782, %v778
      %v991 = vpack.c.b16 %v783, %v779
      %v992 = vpack.c.b16 %v788, %v784
      %v993 = vpack.c.b16 %v789, %v785
      %v994 = vpack.c.b16 %v790, %v786
      %v995 = vpack.c.b16 %v791, %v787
      %v996 = vpack.c.b16 %v796, %v792
      %v997 = vpack.c.b16 %v797, %v793
      %v998 = vpack.c.b16 %v798, %v794
      %v999 = vpack.c.b16 %v799, %v795
      %v1000 = vpack.c.b16 %v804, %v800
      %v1001 = vpack.c.b16 %v805, %v801
      %v1002 = vpack.c.b16 %v806, %v802
      %v1003 = vpack.c.b16 %v807, %v803
      %v1004 = vpack.c.b16 %v812, %v808
      %v1005 = vpack.c.b16 %v813, %v809
      %v1006 = vpack.c.b16 %v814, %v810
      %v1007 = vpack.c.b16 %v815, %v811
      %v1008 = vpack.c.b16 %v820, %v816
      %v1009 = vpack.c.b16 %v821, %v817
      %v1010 = vpack.c.b16 %v822, %v818
      %v1011 = vpack.c.b16 %v823, %v819
      %v1012 = vpack.c.b16 %v828, %v824
      %v1013 = vpack.c.b16 %v829, %v825
      %v1014 = vpack.c.b16 %v830, %v826
      %v1015 = vpack.c.b16 %v831, %v827
      %v1016 = vpack.c.b16 %v836, %v832
      %v1017 = vpack.c.b16 %v837, %v833
      %v1018 = vpack.c.b16 %v838, %v834
      %v1019 = vpack.c.b16 %v839, %v835
      %v1020 = vpack.c.b16 %v844, %v840
      %v1021 = vpack.c.b16 %v845, %v841
      %v1022 = vpack.c.b16 %v846, %v842
      %v1023 = vpack.c.b16 %v847, %v843
      %v1024 = vpack.c.b16 %v852, %v848
      %v1025 = vpack.c.b16 %v853, %v849
      %v1026 = vpack.c.b16 %v854, %v850
      %v1027 = vpack.c.b16 %v855, %v851
      %v1028 = vpack.c.b16 %v860, %v856
      %v1029 = vpack.c.b16 %v861, %v857
      %v1030 = vpack.c.b16 %v862, %v858
      %v1031 = vpack.c.b16 %v863, %v859
      %v1032 = vpack.c.b16 %v868, %v864
      %v1033 = vpack.c.b16 %v869, %v865
      %v1034 = vpack.c.b16 %v870, %v866
      %v1035 = vpack.c.b16 %v871, %v867
      %v1036 = vpack.c.b16 %v876, %v872
      %v1037 = vpack.c.b16 %v877, %v873
      %v1038 = vpack.c.b16 %v878, %v874
      %v1039 = vpack.c.b16 %v879, %v875
      %v1040 = vpack.c.b16 %v884, %v880
      %v1041 = vpack.c.b16 %v885, %v881
      %v1042 = vpack.c.b16 %v886, %v882
      %v1043 = vpack.c.b16 %v887, %v883
      %v1044 = vpack.c.b16 %v892, %v888
      %v1045 = vpack.c.b16 %v893, %v889
      %v1046 = vpack.c.b16 %v894, %v890
      %v1047 = vpack.c.b16 %v895, %v891
      %v1048 = vpack.c.b16 %v900, %v896
      %v1049 = vpack.c.b16 %v901, %v897
      %v1050 = vpack.c.b16 %v902, %v898
      %v1051 = vpack.c.b16 %v903, %v899
      %v1052 = vpack.c.b16 %v908, %v904
      %v1053 = vpack.c.b16 %v909, %v905
      %v1054 = vpack.c.b16 %v910, %v906
      %v1055 = vpack.c.b16 %v911, %v907
      %v1056 = vpack.c.b16 %v916, %v912
      %v1057 = vpack.c.b16 %v917, %v913
      %v1058 = vpack.c.b16 %v918, %v914
      %v1059 = vpack.c.b16 %v919, %v915
      %v1060 = vpack.c.b16 %v924, %v920
      %v1061 = vpack.c.b16 %v925, %v921
      %v1062 = vpack.c.b16 %v926, %v922
      %v1063 = vpack.c.b16 %v927, %v923
      %v1064 = vpack.c.b16 %v932, %v928
      %v1065 = vpack.c.b16 %v933, %v929
      %v1066 = vpack.c.b16 %v934, %v930
      %v1067 = vpack.c.b16 %v935, %v931
      %v1068 = vpack.c.b16 %v940, %v936
      %v1069 = vpack.c.b16 %v941, %v937
      %v1070 = vpack.c.b16 %v942, %v938
      %v1071 = vpack.c.b16 %v943, %v939
      %v1264 = vunpack.c.l.b16 %v496
      %v1265 = vunpack.c.l.b16 %v497
      %v1266 = vunpack.c.l.b16 %v498
      %v1267 = vunpack.c.l.b16 %v499
      %v1268 = vunpack.c.l.b16 %v500
      %v1269 = vunpack.c.l.b16 %v501
      %v1270 = vunpack.c.l.b16 %v502
      %v1271 = vunpack.c.l.b16 %v503
      %v1272 = vunpack.c.l.b16 %v504
      %v1273 = vunpack.c.l.b16 %v505
      %v1274 = vunpack.c.l.b16 %v506
      %v1275 = vunpack.c.l.b16 %v507
      %v1276 = vunpack.c.l.b16 %v508
      %v1277 = vunpack.c.l.b16 %v509
      %v1278 = vunpack.c.l.b16 %v510
      %v1279 = vunpack.c.l.b16 %v511
      %v1280 = vunpack.c.l.b16 %v512
      %v1281 = vunpack.c.l.b16 %v513
      %v1282 = vunpack.c.l.b16 %v514
      %v1283 = vunpack.c.l.b16 %v515
      %v1284 = vunpack.c.l.b16 %v516
      %v1285 = vunpack.c.l.b16 %v517
      %v1286 = vunpack.c.l.b16 %v518
      %v1287 = vunpack.c.l.b16 %v519
      %v1288 = vunpack.c.l.b16 %v520
      %v1289 = vunpack.c.l.b16 %v521
      %v1290 = vunpack.c.l.b16 %v522
      %v1291 = vunpack.c.l.b16 %v523
      %v1292 = vunpack.c.l.b16 %v524
      %v1293 = vunpack.c.l.b16 %v525
      %v1294 = vunpack.c.l.b16 %v526
      %v1295 = vunpack.c.l.b16 %v527
      %v1296 = vunpack.c.l.b16 %v528
      %v1297 = vunpack.c.l.b16 %v529
      %v1298 = vunpack.c.l.b16 %v530
      %v1299 = vunpack.c.l.b16 %v531
      %v1300 = vunpack.c.l.b16 %v532
      %v1301 = vunpack.c.l.b16 %v533
      %v1302 = vunpack.c.l.b16 %v534
      %v1303 = vunpack.c.l.b16 %v535
      %v1304 = vunpack.c.l.b16 %v536
      %v1305 = vunpack.c.l.b16 %v537
      %v1306 = vunpack.c.l.b16 %v538
      %v1307 = vunpack.c.l.b16 %v539
      %v1308 = vunpack.c.l.b16 %v540
      %v1309 = vunpack.c.l.b16 %v541
      %v1310 = vunpack.c.l.b16 %v542
      %v1311 = vunpack.c.l.b16 %v543
      %v1312 = vunpack.c.l.b16 %v544
      %v1313 = vunpack.c.l.b16 %v545
      %v1314 = vunpack.c.l.b16 %v546
      %v1315 = vunpack.c.l.b16 %v547
      %v1316 = vunpack.c.l.b16 %v548
      %v1317 = vunpack.c.l.b16 %v549
      %v1318 = vunpack.c.l.b16 %v550
      %v1319 = vunpack.c.l.b16 %v551
      %v1320 = vunpack.c.l.b16 %v552
      %v1321 = vunpack.c.l.b16 %v553
      %v1322 = vunpack.c.l.b16 %v554
      %v1323 = vunpack.c.l.b16 %v555
      %v1324 = vunpack.c.l.b16 %v556
      %v1325 = vunpack.c.l.b16 %v557
      %v1326 = vunpack.c.l.b16 %v558
      %v1327 = vunpack.c.l.b16 %v559
      %v1328 = vpack.c.b16 %v1265, %v1264
      %v1329 = vpack.c.b16 %v1267, %v1266
      %v1330 = vpack.c.b16 %v1269, %v1268
      %v1331 = vpack.c.b16 %v1271, %v1270
      %v1332 = vpack.c.b16 %v1273, %v1272
      %v1333 = vpack.c.b16 %v1275, %v1274
      %v1334 = vpack.c.b16 %v1277, %v1276
      %v1335 = vpack.c.b16 %v1279, %v1278
      %v1336 = vpack.c.b16 %v1281, %v1280
      %v1337 = vpack.c.b16 %v1283, %v1282
      %v1338 = vpack.c.b16 %v1285, %v1284
      %v1339 = vpack.c.b16 %v1287, %v1286
      %v1340 = vpack.c.b16 %v1289, %v1288
      %v1341 = vpack.c.b16 %v1291, %v1290
      %v1342 = vpack.c.b16 %v1293, %v1292
      %v1343 = vpack.c.b16 %v1295, %v1294
      %v1344 = vpack.c.b16 %v1297, %v1296
      %v1345 = vpack.c.b16 %v1299, %v1298
      %v1346 = vpack.c.b16 %v1301, %v1300
      %v1347 = vpack.c.b16 %v1303, %v1302
      %v1348 = vpack.c.b16 %v1305, %v1304
      %v1349 = vpack.c.b16 %v1307, %v1306
      %v1350 = vpack.c.b16 %v1309, %v1308
      %v1351 = vpack.c.b16 %v1311, %v1310
      %v1352 = vpack.c.b16 %v1313, %v1312
      %v1353 = vpack.c.b16 %v1315, %v1314
      %v1354 = vpack.c.b16 %v1317, %v1316
      %v1355 = vpack.c.b16 %v1319, %v1318
      %v1356 = vpack.c.b16 %v1321, %v1320
      %v1357 = vpack.c.b16 %v1323, %v1322
      %v1358 = vpack.c.b16 %v1325, %v1324
      %v1359 = vpack.c.b16 %v1327, %v1326
      %1392 = vmatprep.subr.bf16.mxu0 0
      %1393 = vmatpush1.bf16.msra.mxu0 %v1335
      %1394 = vmatprep.subr.bf16.mxu0 0
      %1395 = vmatpush1.bf16.msra.mxu0 %v1334
      %1396 = vmatprep.subr.bf16.mxu0 0
      %1397 = vmatpush1.bf16.msra.mxu0 %v1333
      %1398 = vmatprep.subr.bf16.mxu0 0
      %1399 = vmatpush1.bf16.msra.mxu0 %v1332
      %1400 = vmatprep.subr.bf16.mxu0 0
      %1401 = vmatpush1.bf16.msra.mxu0 %v1331
      %1402 = vmatprep.subr.bf16.mxu0 0
      %1403 = vmatpush1.bf16.msra.mxu0 %v1330
      %1404 = vmatprep.subr.bf16.mxu0 0
      %1405 = vmatpush1.bf16.msra.mxu0 %v1329
      %1406 = vmatprep.subr.bf16.mxu0 0
      %1407 = vmatpush1.bf16.msra.mxu0 %v1328
      %1408 = vmatprep.subr.bf16.mxu0 0
      %1409 = vmatpush2.bf16.msra.mxu0 %v1343
      %1410 = vmatprep.subr.bf16.mxu0 0
      %1411 = vmatpush2.bf16.msra.mxu0 %v1342
      %1412 = vmatprep.subr.bf16.mxu0 0
      %1413 = vmatpush2.bf16.msra.mxu0 %v1341
      %1414 = vmatprep.subr.bf16.mxu0 0
      %1415 = vmatpush2.bf16.msra.mxu0 %v1340
      %1416 = vmatprep.subr.bf16.mxu0 0
      %1417 = vmatpush2.bf16.msra.mxu0 %v1339
      %1418 = vmatprep.subr.bf16.mxu0 0
      %1419 = vmatpush2.bf16.msra.mxu0 %v1338
      %1420 = vmatprep.subr.bf16.mxu0 0
      %1421 = vmatpush2.bf16.msra.mxu0 %v1337
      %1422 = vmatprep.subr.bf16.mxu0 0
      %1423 = vmatpush2.bf16.msra.mxu0 %v1336
      %1424 = vmatprep.mubr.bf16.mxu0 %v945
      %1425 = vmatmul.mubr.bf16.gmra.mxu0 %v944
      %v1426 = vpop.f32.mrf.mxu0
      %v1427 = vadd.f32 0.0, %v1426
      %v1428 = vpop.f32.mrf.mxu0
      %v1429 = vpop.f32.mrf.mxu0
      %v1430 = vadd.f32 0.0, %v1429
      %v1431 = vpop.f32.mrf.mxu0
      %1432 = vmatprep.mubr.bf16.mxu0 %v949
      %1433 = vmatmul.mubr.bf16.gmra.mxu0 %v948
      %v1434 = vpop.f32.mrf.mxu0
      %v1435 = vadd.f32 0.0, %v1434
      %v1436 = vpop.f32.mrf.mxu0
      %v1437 = vpop.f32.mrf.mxu0
      %v1438 = vadd.f32 0.0, %v1437
      %v1439 = vpop.f32.mrf.mxu0
      %1440 = vmatprep.mubr.bf16.mxu0 %v953
      %1441 = vmatmul.mubr.bf16.gmra.mxu0 %v952
      %v1442 = vpop.f32.mrf.mxu0
      %v1443 = vadd.f32 0.0, %v1442
      %v1444 = vpop.f32.mrf.mxu0
      %v1445 = vpop.f32.mrf.mxu0
      %v1446 = vadd.f32 0.0, %v1445
      %v1447 = vpop.f32.mrf.mxu0
      %1448 = vmatprep.mubr.bf16.mxu0 %v957
      %1449 = vmatmul.mubr.bf16.gmra.mxu0 %v956
      %v1450 = vpop.f32.mrf.mxu0
      %v1451 = vadd.f32 0.0, %v1450
      %v1452 = vpop.f32.mrf.mxu0
      %v1453 = vpop.f32.mrf.mxu0
      %v1454 = vadd.f32 0.0, %v1453
      %v1455 = vpop.f32.mrf.mxu0
      %1456 = vmatprep.mubr.bf16.mxu0 %v961
      %1457 = vmatmul.mubr.bf16.gmra.mxu0 %v960
      %v1458 = vpop.f32.mrf.mxu0
      %v1459 = vadd.f32 0.0, %v1458
      %v1460 = vpop.f32.mrf.mxu0
      %v1461 = vpop.f32.mrf.mxu0
      %v1462 = vadd.f32 0.0, %v1461
      %v1463 = vpop.f32.mrf.mxu0
      %1464 = vmatprep.mubr.bf16.mxu0 %v965
      %1465 = vmatmul.mubr.bf16.gmra.mxu0 %v964
      %v1466 = vpop.f32.mrf.mxu0
      %v1467 = vadd.f32 0.0, %v1466
      %v1468 = vpop.f32.mrf.mxu0
      %v1469 = vpop.f32.mrf.mxu0
      %v1470 = vadd.f32 0.0, %v1469
      %v1471 = vpop.f32.mrf.mxu0
      %1472 = vmatprep.mubr.bf16.mxu0 %v969
      %1473 = vmatmul.mubr.bf16.gmra.mxu0 %v968
      %v1474 = vpop.f32.mrf.mxu0
      %v1475 = vadd.f32 0.0, %v1474
      %v1476 = vpop.f32.mrf.mxu0
      %v1477 = vpop.f32.mrf.mxu0
      %v1478 = vadd.f32 0.0, %v1477
      %v1479 = vpop.f32.mrf.mxu0
      %1480 = vmatprep.mubr.bf16.mxu0 %v973
      %1481 = vmatmul.mubr.bf16.gmra.mxu0 %v972
      %v1482 = vpop.f32.mrf.mxu0
      %v1483 = vadd.f32 0.0, %v1482
      %v1484 = vpop.f32.mrf.mxu0
      %v1485 = vpop.f32.mrf.mxu0
      %v1486 = vadd.f32 0.0, %v1485
      %v1487 = vpop.f32.mrf.mxu0
      %1488 = vmatprep.mubr.bf16.mxu0 %v977
      %1489 = vmatmul.mubr.bf16.gmra.mxu0 %v976
      %v1490 = vpop.f32.mrf.mxu0
      %v1491 = vadd.f32 0.0, %v1490
      %v1492 = vpop.f32.mrf.mxu0
      %v1493 = vpop.f32.mrf.mxu0
      %v1494 = vadd.f32 0.0, %v1493
      %v1495 = vpop.f32.mrf.mxu0
      %1496 = vmatprep.mubr.bf16.mxu0 %v981
      %1497 = vmatmul.mubr.bf16.gmra.mxu0 %v980
      %v1498 = vpop.f32.mrf.mxu0
      %v1499 = vadd.f32 0.0, %v1498
      %v1500 = vpop.f32.mrf.mxu0
      %v1501 = vpop.f32.mrf.mxu0
      %v1502 = vadd.f32 0.0, %v1501
      %v1503 = vpop.f32.mrf.mxu0
      %1504 = vmatprep.mubr.bf16.mxu0 %v985
      %1505 = vmatmul.mubr.bf16.gmra.mxu0 %v984
      %v1506 = vpop.f32.mrf.mxu0
      %v1507 = vadd.f32 0.0, %v1506
      %v1508 = vpop.f32.mrf.mxu0
      %v1509 = vpop.f32.mrf.mxu0
      %v1510 = vadd.f32 0.0, %v1509
      %v1511 = vpop.f32.mrf.mxu0
      %1512 = vmatprep.mubr.bf16.mxu0 %v989
      %1513 = vmatmul.mubr.bf16.gmra.mxu0 %v988
      %v1514 = vpop.f32.mrf.mxu0
      %v1515 = vadd.f32 0.0, %v1514
      %v1516 = vpop.f32.mrf.mxu0
      %v1517 = vpop.f32.mrf.mxu0
      %v1518 = vadd.f32 0.0, %v1517
      %v1519 = vpop.f32.mrf.mxu0
      %1520 = vmatprep.mubr.bf16.mxu0 %v993
      %1521 = vmatmul.mubr.bf16.gmra.mxu0 %v992
      %v1522 = vpop.f32.mrf.mxu0
      %v1523 = vadd.f32 0.0, %v1522
      %v1524 = vpop.f32.mrf.mxu0
      %v1525 = vpop.f32.mrf.mxu0
      %v1526 = vadd.f32 0.0, %v1525
      %v1527 = vpop.f32.mrf.mxu0
      %1528 = vmatprep.mubr.bf16.mxu0 %v997
      %1529 = vmatmul.mubr.bf16.gmra.mxu0 %v996
      %v1530 = vpop.f32.mrf.mxu0
      %v1531 = vadd.f32 0.0, %v1530
      %v1532 = vpop.f32.mrf.mxu0
      %v1533 = vpop.f32.mrf.mxu0
      %v1534 = vadd.f32 0.0, %v1533
      %v1535 = vpop.f32.mrf.mxu0
      %1536 = vmatprep.mubr.bf16.mxu0 %v1001
      %1537 = vmatmul.mubr.bf16.gmra.mxu0 %v1000
      %v1538 = vpop.f32.mrf.mxu0
      %v1539 = vadd.f32 0.0, %v1538
      %v1540 = vpop.f32.mrf.mxu0
      %v1541 = vpop.f32.mrf.mxu0
      %v1542 = vadd.f32 0.0, %v1541
      %v1543 = vpop.f32.mrf.mxu0
      %1544 = vmatprep.mubr.bf16.mxu0 %v1005
      %1545 = vmatmul.mubr.bf16.gmra.mxu0 %v1004
      %v1546 = vpop.f32.mrf.mxu0
      %v1547 = vadd.f32 0.0, %v1546
      %v1548 = vpop.f32.mrf.mxu0
      %v1549 = vpop.f32.mrf.mxu0
      %v1550 = vadd.f32 0.0, %v1549
      %v1551 = vpop.f32.mrf.mxu0
      %1552 = vmatprep.mubr.bf16.mxu0 %v1009
      %1553 = vmatmul.mubr.bf16.gmra.mxu0 %v1008
      %v1554 = vpop.f32.mrf.mxu0
      %v1555 = vadd.f32 0.0, %v1554
      %v1556 = vpop.f32.mrf.mxu0
      %v1557 = vpop.f32.mrf.mxu0
      %v1558 = vadd.f32 0.0, %v1557
      %v1559 = vpop.f32.mrf.mxu0
      %1560 = vmatprep.mubr.bf16.mxu0 %v1013
      %1561 = vmatmul.mubr.bf16.gmra.mxu0 %v1012
      %v1562 = vpop.f32.mrf.mxu0
      %v1563 = vadd.f32 0.0, %v1562
      %v1564 = vpop.f32.mrf.mxu0
      %v1565 = vpop.f32.mrf.mxu0
      %v1566 = vadd.f32 0.0, %v1565
      %v1567 = vpop.f32.mrf.mxu0
      %1568 = vmatprep.mubr.bf16.mxu0 %v1017
      %1569 = vmatmul.mubr.bf16.gmra.mxu0 %v1016
      %v1570 = vpop.f32.mrf.mxu0
      %v1571 = vadd.f32 0.0, %v1570
      %v1572 = vpop.f32.mrf.mxu0
      %v1573 = vpop.f32.mrf.mxu0
      %v1574 = vadd.f32 0.0, %v1573
      %v1575 = vpop.f32.mrf.mxu0
      %1576 = vmatprep.mubr.bf16.mxu0 %v1021
      %1577 = vmatmul.mubr.bf16.gmra.mxu0 %v1020
      %v1578 = vpop.f32.mrf.mxu0
      %v1579 = vadd.f32 0.0, %v1578
      %v1580 = vpop.f32.mrf.mxu0
      %v1581 = vpop.f32.mrf.mxu0
      %v1582 = vadd.f32 0.0, %v1581
      %v1583 = vpop.f32.mrf.mxu0
      %1584 = vmatprep.mubr.bf16.mxu0 %v1025
      %1585 = vmatmul.mubr.bf16.gmra.mxu0 %v1024
      %v1586 = vpop.f32.mrf.mxu0
      %v1587 = vadd.f32 0.0, %v1586
      %v1588 = vpop.f32.mrf.mxu0
      %v1589 = vpop.f32.mrf.mxu0
      %v1590 = vadd.f32 0.0, %v1589
      %v1591 = vpop.f32.mrf.mxu0
      %1592 = vmatprep.mubr.bf16.mxu0 %v1029
      %1593 = vmatmul.mubr.bf16.gmra.mxu0 %v1028
      %v1594 = vpop.f32.mrf.mxu0
      %v1595 = vadd.f32 0.0, %v1594
      %v1596 = vpop.f32.mrf.mxu0
      %v1597 = vpop.f32.mrf.mxu0
      %v1598 = vadd.f32 0.0, %v1597
      %v1599 = vpop.f32.mrf.mxu0
      %1600 = vmatprep.mubr.bf16.mxu0 %v1033
      %1601 = vmatmul.mubr.bf16.gmra.mxu0 %v1032
      %v1602 = vpop.f32.mrf.mxu0
      %v1603 = vadd.f32 0.0, %v1602
      %v1604 = vpop.f32.mrf.mxu0
      %v1605 = vpop.f32.mrf.mxu0
      %v1606 = vadd.f32 0.0, %v1605
      %v1607 = vpop.f32.mrf.mxu0
      %1608 = vmatprep.mubr.bf16.mxu0 %v1037
      %1609 = vmatmul.mubr.bf16.gmra.mxu0 %v1036
      %v1610 = vpop.f32.mrf.mxu0
      %v1611 = vadd.f32 0.0, %v1610
      %v1612 = vpop.f32.mrf.mxu0
      %v1613 = vpop.f32.mrf.mxu0
      %v1614 = vadd.f32 0.0, %v1613
      %v1615 = vpop.f32.mrf.mxu0
      %1616 = vmatprep.mubr.bf16.mxu0 %v1041
      %1617 = vmatmul.mubr.bf16.gmra.mxu0 %v1040
      %v1618 = vpop.f32.mrf.mxu0
      %v1619 = vadd.f32 0.0, %v1618
      %v1620 = vpop.f32.mrf.mxu0
      %v1621 = vpop.f32.mrf.mxu0
      %v1622 = vadd.f32 0.0, %v1621
      %v1623 = vpop.f32.mrf.mxu0
      %1624 = vmatprep.mubr.bf16.mxu0 %v1045
      %1625 = vmatmul.mubr.bf16.gmra.mxu0 %v1044
      %v1626 = vpop.f32.mrf.mxu0
      %v1627 = vadd.f32 0.0, %v1626
      %v1628 = vpop.f32.mrf.mxu0
      %v1629 = vpop.f32.mrf.mxu0
      %v1630 = vadd.f32 0.0, %v1629
      %v1631 = vpop.f32.mrf.mxu0
      %1632 = vmatprep.mubr.bf16.mxu0 %v1049
      %1633 = vmatmul.mubr.bf16.gmra.mxu0 %v1048
      %v1634 = vpop.f32.mrf.mxu0
      %v1635 = vadd.f32 0.0, %v1634
      %v1636 = vpop.f32.mrf.mxu0
      %v1637 = vpop.f32.mrf.mxu0
      %v1638 = vadd.f32 0.0, %v1637
      %v1639 = vpop.f32.mrf.mxu0
      %1640 = vmatprep.mubr.bf16.mxu0 %v1053
      %1641 = vmatmul.mubr.bf16.gmra.mxu0 %v1052
      %v1642 = vpop.f32.mrf.mxu0
      %v1643 = vadd.f32 0.0, %v1642
      %v1644 = vpop.f32.mrf.mxu0
      %v1645 = vpop.f32.mrf.mxu0
      %v1646 = vadd.f32 0.0, %v1645
      %v1647 = vpop.f32.mrf.mxu0
      %1648 = vmatprep.mubr.bf16.mxu0 %v1057
      %1649 = vmatmul.mubr.bf16.gmra.mxu0 %v1056
      %v1650 = vpop.f32.mrf.mxu0
      %v1651 = vadd.f32 0.0, %v1650
      %v1652 = vpop.f32.mrf.mxu0
      %v1653 = vpop.f32.mrf.mxu0
      %v1654 = vadd.f32 0.0, %v1653
      %v1655 = vpop.f32.mrf.mxu0
      %1656 = vmatprep.mubr.bf16.mxu0 %v1061
      %1657 = vmatmul.mubr.bf16.gmra.mxu0 %v1060
      %v1658 = vpop.f32.mrf.mxu0
      %v1659 = vadd.f32 0.0, %v1658
      %v1660 = vpop.f32.mrf.mxu0
      %v1661 = vpop.f32.mrf.mxu0
      %v1662 = vadd.f32 0.0, %v1661
      %v1663 = vpop.f32.mrf.mxu0
      %1664 = vmatprep.mubr.bf16.mxu0 %v1065
      %1665 = vmatmul.mubr.bf16.gmra.mxu0 %v1064
      %v1666 = vpop.f32.mrf.mxu0
      %v1667 = vadd.f32 0.0, %v1666
      %v1668 = vpop.f32.mrf.mxu0
      %v1669 = vpop.f32.mrf.mxu0
      %v1670 = vadd.f32 0.0, %v1669
      %v1671 = vpop.f32.mrf.mxu0
      %1672 = vmatprep.mubr.bf16.mxu0 %v1069
      %1673 = vmatmul.mubr.bf16.gmra.mxu0 %v1068
      %v1674 = vpop.f32.mrf.mxu0
      %v1675 = vadd.f32 0.0, %v1674
      %v1676 = vpop.f32.mrf.mxu0
      %v1677 = vpop.f32.mrf.mxu0
      %v1678 = vadd.f32 0.0, %v1677
      %v1679 = vpop.f32.mrf.mxu0
      %1680 = vdwg.mxu0
      %1681 = vmatprep.subr.bf16.mxu0 0
      %1682 = vmatpush1.bf16.msra.mxu0 %v1351
      %1683 = vmatprep.subr.bf16.mxu0 0
      %1684 = vmatpush1.bf16.msra.mxu0 %v1350
      %1685 = vmatprep.subr.bf16.mxu0 0
      %1686 = vmatpush1.bf16.msra.mxu0 %v1349
      %1687 = vmatprep.subr.bf16.mxu0 0
      %1688 = vmatpush1.bf16.msra.mxu0 %v1348
      %1689 = vmatprep.subr.bf16.mxu0 0
      %1690 = vmatpush1.bf16.msra.mxu0 %v1347
      %1691 = vmatprep.subr.bf16.mxu0 0
      %1692 = vmatpush1.bf16.msra.mxu0 %v1346
      %1693 = vmatprep.subr.bf16.mxu0 0
      %1694 = vmatpush1.bf16.msra.mxu0 %v1345
      %1695 = vmatprep.subr.bf16.mxu0 0
      %1696 = vmatpush1.bf16.msra.mxu0 %v1344
      %1697 = vmatprep.subr.bf16.mxu0 0
      %1698 = vmatpush2.bf16.msra.mxu0 %v1359
      %1699 = vmatprep.subr.bf16.mxu0 0
      %1700 = vmatpush2.bf16.msra.mxu0 %v1358
      %1701 = vmatprep.subr.bf16.mxu0 0
      %1702 = vmatpush2.bf16.msra.mxu0 %v1357
      %1703 = vmatprep.subr.bf16.mxu0 0
      %1704 = vmatpush2.bf16.msra.mxu0 %v1356
      %1705 = vmatprep.subr.bf16.mxu0 0
      %1706 = vmatpush2.bf16.msra.mxu0 %v1355
      %1707 = vmatprep.subr.bf16.mxu0 0
      %1708 = vmatpush2.bf16.msra.mxu0 %v1354
      %1709 = vmatprep.subr.bf16.mxu0 0
      %1710 = vmatpush2.bf16.msra.mxu0 %v1353
      %1711 = vmatprep.subr.bf16.mxu0 0
      %1712 = vmatpush2.bf16.msra.mxu0 %v1352
      %1713 = vmatprep.mubr.bf16.mxu0 %v947
      %1714 = vmatmul.mubr.bf16.gmra.mxu0 %v946
      %v1715 = vpop.f32.mrf.mxu0
      %v1716 = vadd.f32 %v1427, %v1715
      %v1717 = vpop.f32.mrf.mxu0
      %v1718 = vpop.f32.mrf.mxu0
      %v1719 = vadd.f32 %v1430, %v1718
      %v1720 = vpop.f32.mrf.mxu0
      %1721 = vmatprep.mubr.bf16.mxu0 %v951
      %1722 = vmatmul.mubr.bf16.gmra.mxu0 %v950
      %v1723 = vpop.f32.mrf.mxu0
      %v1724 = vadd.f32 %v1435, %v1723
      %v1725 = vpop.f32.mrf.mxu0
      %v1726 = vpop.f32.mrf.mxu0
      %v1727 = vadd.f32 %v1438, %v1726
      %v1728 = vpop.f32.mrf.mxu0
      %1729 = vmatprep.mubr.bf16.mxu0 %v955
      %1730 = vmatmul.mubr.bf16.gmra.mxu0 %v954
      %v1731 = vpop.f32.mrf.mxu0
      %v1732 = vadd.f32 %v1443, %v1731
      %v1733 = vpop.f32.mrf.mxu0
      %v1734 = vpop.f32.mrf.mxu0
      %v1735 = vadd.f32 %v1446, %v1734
      %v1736 = vpop.f32.mrf.mxu0
      %1737 = vmatprep.mubr.bf16.mxu0 %v959
      %1738 = vmatmul.mubr.bf16.gmra.mxu0 %v958
      %v1739 = vpop.f32.mrf.mxu0
      %v1740 = vadd.f32 %v1451, %v1739
      %v1741 = vpop.f32.mrf.mxu0
      %v1742 = vpop.f32.mrf.mxu0
      %v1743 = vadd.f32 %v1454, %v1742
      %v1744 = vpop.f32.mrf.mxu0
      %1745 = vmatprep.mubr.bf16.mxu0 %v963
      %1746 = vmatmul.mubr.bf16.gmra.mxu0 %v962
      %v1747 = vpop.f32.mrf.mxu0
      %v1748 = vadd.f32 %v1459, %v1747
      %v1749 = vpop.f32.mrf.mxu0
      %v1750 = vpop.f32.mrf.mxu0
      %v1751 = vadd.f32 %v1462, %v1750
      %v1752 = vpop.f32.mrf.mxu0
      %1753 = vmatprep.mubr.bf16.mxu0 %v967
      %1754 = vmatmul.mubr.bf16.gmra.mxu0 %v966
      %v1755 = vpop.f32.mrf.mxu0
      %v1756 = vadd.f32 %v1467, %v1755
      %v1757 = vpop.f32.mrf.mxu0
      %v1758 = vpop.f32.mrf.mxu0
      %v1759 = vadd.f32 %v1470, %v1758
      %v1760 = vpop.f32.mrf.mxu0
      %1761 = vmatprep.mubr.bf16.mxu0 %v971
      %1762 = vmatmul.mubr.bf16.gmra.mxu0 %v970
      %v1763 = vpop.f32.mrf.mxu0
      %v1764 = vadd.f32 %v1475, %v1763
      %v1765 = vpop.f32.mrf.mxu0
      %v1766 = vpop.f32.mrf.mxu0
      %v1767 = vadd.f32 %v1478, %v1766
      %v1768 = vpop.f32.mrf.mxu0
      %1769 = vmatprep.mubr.bf16.mxu0 %v975
      %1770 = vmatmul.mubr.bf16.gmra.mxu0 %v974
      %v1771 = vpop.f32.mrf.mxu0
      %v1772 = vadd.f32 %v1483, %v1771
      %v1773 = vpop.f32.mrf.mxu0
      %v1774 = vpop.f32.mrf.mxu0
      %v1775 = vadd.f32 %v1486, %v1774
      %v1776 = vpop.f32.mrf.mxu0
      %1777 = vmatprep.mubr.bf16.mxu0 %v979
      %1778 = vmatmul.mubr.bf16.gmra.mxu0 %v978
      %v1779 = vpop.f32.mrf.mxu0
      %v1780 = vadd.f32 %v1491, %v1779
      %v1781 = vpop.f32.mrf.mxu0
      %v1782 = vpop.f32.mrf.mxu0
      %v1783 = vadd.f32 %v1494, %v1782
      %v1784 = vpop.f32.mrf.mxu0
      %1785 = vmatprep.mubr.bf16.mxu0 %v983
      %1786 = vmatmul.mubr.bf16.gmra.mxu0 %v982
      %v1787 = vpop.f32.mrf.mxu0
      %v1788 = vadd.f32 %v1499, %v1787
      %v1789 = vpop.f32.mrf.mxu0
      %v1790 = vpop.f32.mrf.mxu0
      %v1791 = vadd.f32 %v1502, %v1790
      %v1792 = vpop.f32.mrf.mxu0
      %1793 = vmatprep.mubr.bf16.mxu0 %v987
      %1794 = vmatmul.mubr.bf16.gmra.mxu0 %v986
      %v1795 = vpop.f32.mrf.mxu0
      %v1796 = vadd.f32 %v1507, %v1795
      %v1797 = vpop.f32.mrf.mxu0
      %v1798 = vpop.f32.mrf.mxu0
      %v1799 = vadd.f32 %v1510, %v1798
      %v1800 = vpop.f32.mrf.mxu0
      %1801 = vmatprep.mubr.bf16.mxu0 %v991
      %1802 = vmatmul.mubr.bf16.gmra.mxu0 %v990
      %v1803 = vpop.f32.mrf.mxu0
      %v1804 = vadd.f32 %v1515, %v1803
      %v1805 = vpop.f32.mrf.mxu0
      %v1806 = vpop.f32.mrf.mxu0
      %v1807 = vadd.f32 %v1518, %v1806
      %v1808 = vpop.f32.mrf.mxu0
      %1809 = vmatprep.mubr.bf16.mxu0 %v995
      %1810 = vmatmul.mubr.bf16.gmra.mxu0 %v994
      %v1811 = vpop.f32.mrf.mxu0
      %v1812 = vadd.f32 %v1523, %v1811
      %v1813 = vpop.f32.mrf.mxu0
      %v1814 = vpop.f32.mrf.mxu0
      %v1815 = vadd.f32 %v1526, %v1814
      %v1816 = vpop.f32.mrf.mxu0
      %1817 = vmatprep.mubr.bf16.mxu0 %v999
      %1818 = vmatmul.mubr.bf16.gmra.mxu0 %v998
      %v1819 = vpop.f32.mrf.mxu0
      %v1820 = vadd.f32 %v1531, %v1819
      %v1821 = vpop.f32.mrf.mxu0
      %v1822 = vpop.f32.mrf.mxu0
      %v1823 = vadd.f32 %v1534, %v1822
      %v1824 = vpop.f32.mrf.mxu0
      %1825 = vmatprep.mubr.bf16.mxu0 %v1003
      %1826 = vmatmul.mubr.bf16.gmra.mxu0 %v1002
      %v1827 = vpop.f32.mrf.mxu0
      %v1828 = vadd.f32 %v1539, %v1827
      %v1829 = vpop.f32.mrf.mxu0
      %v1830 = vpop.f32.mrf.mxu0
      %v1831 = vadd.f32 %v1542, %v1830
      %v1832 = vpop.f32.mrf.mxu0
      %1833 = vmatprep.mubr.bf16.mxu0 %v1007
      %1834 = vmatmul.mubr.bf16.gmra.mxu0 %v1006
      %v1835 = vpop.f32.mrf.mxu0
      %v1836 = vadd.f32 %v1547, %v1835
      %v1837 = vpop.f32.mrf.mxu0
      %v1838 = vpop.f32.mrf.mxu0
      %v1839 = vadd.f32 %v1550, %v1838
      %v1840 = vpop.f32.mrf.mxu0
      %1841 = vmatprep.mubr.bf16.mxu0 %v1011
      %1842 = vmatmul.mubr.bf16.gmra.mxu0 %v1010
      %v1843 = vpop.f32.mrf.mxu0
      %v1844 = vadd.f32 %v1555, %v1843
      %v1845 = vpop.f32.mrf.mxu0
      %v1846 = vpop.f32.mrf.mxu0
      %v1847 = vadd.f32 %v1558, %v1846
      %v1848 = vpop.f32.mrf.mxu0
      %1849 = vmatprep.mubr.bf16.mxu0 %v1015
      %1850 = vmatmul.mubr.bf16.gmra.mxu0 %v1014
      %v1851 = vpop.f32.mrf.mxu0
      %v1852 = vadd.f32 %v1563, %v1851
      %v1853 = vpop.f32.mrf.mxu0
      %v1854 = vpop.f32.mrf.mxu0
      %v1855 = vadd.f32 %v1566, %v1854
      %v1856 = vpop.f32.mrf.mxu0
      %1857 = vmatprep.mubr.bf16.mxu0 %v1019
      %1858 = vmatmul.mubr.bf16.gmra.mxu0 %v1018
      %v1859 = vpop.f32.mrf.mxu0
      %v1860 = vadd.f32 %v1571, %v1859
      %v1861 = vpop.f32.mrf.mxu0
      %v1862 = vpop.f32.mrf.mxu0
      %v1863 = vadd.f32 %v1574, %v1862
      %v1864 = vpop.f32.mrf.mxu0
      %1865 = vmatprep.mubr.bf16.mxu0 %v1023
      %1866 = vmatmul.mubr.bf16.gmra.mxu0 %v1022
      %v1867 = vpop.f32.mrf.mxu0
      %v1868 = vadd.f32 %v1579, %v1867
      %v1869 = vpop.f32.mrf.mxu0
      %v1870 = vpop.f32.mrf.mxu0
      %v1871 = vadd.f32 %v1582, %v1870
      %v1872 = vpop.f32.mrf.mxu0
      %1873 = vmatprep.mubr.bf16.mxu0 %v1027
      %1874 = vmatmul.mubr.bf16.gmra.mxu0 %v1026
      %v1875 = vpop.f32.mrf.mxu0
      %v1876 = vadd.f32 %v1587, %v1875
      %v1877 = vpop.f32.mrf.mxu0
      %v1878 = vpop.f32.mrf.mxu0
      %v1879 = vadd.f32 %v1590, %v1878
      %v1880 = vpop.f32.mrf.mxu0
      %1881 = vmatprep.mubr.bf16.mxu0 %v1031
      %1882 = vmatmul.mubr.bf16.gmra.mxu0 %v1030
      %v1883 = vpop.f32.mrf.mxu0
      %v1884 = vadd.f32 %v1595, %v1883
      %v1885 = vpop.f32.mrf.mxu0
      %v1886 = vpop.f32.mrf.mxu0
      %v1887 = vadd.f32 %v1598, %v1886
      %v1888 = vpop.f32.mrf.mxu0
      %1889 = vmatprep.mubr.bf16.mxu0 %v1035
      %1890 = vmatmul.mubr.bf16.gmra.mxu0 %v1034
      %v1891 = vpop.f32.mrf.mxu0
      %v1892 = vadd.f32 %v1603, %v1891
      %v1893 = vpop.f32.mrf.mxu0
      %v1894 = vpop.f32.mrf.mxu0
      %v1895 = vadd.f32 %v1606, %v1894
      %v1896 = vpop.f32.mrf.mxu0
      %1897 = vmatprep.mubr.bf16.mxu0 %v1039
      %1898 = vmatmul.mubr.bf16.gmra.mxu0 %v1038
      %v1899 = vpop.f32.mrf.mxu0
      %v1900 = vadd.f32 %v1611, %v1899
      %v1901 = vpop.f32.mrf.mxu0
      %v1902 = vpop.f32.mrf.mxu0
      %v1903 = vadd.f32 %v1614, %v1902
      %v1904 = vpop.f32.mrf.mxu0
      %1905 = vmatprep.mubr.bf16.mxu0 %v1043
      %1906 = vmatmul.mubr.bf16.gmra.mxu0 %v1042
      %v1907 = vpop.f32.mrf.mxu0
      %v1908 = vadd.f32 %v1619, %v1907
      %v1909 = vpop.f32.mrf.mxu0
      %v1910 = vpop.f32.mrf.mxu0
      %v1911 = vadd.f32 %v1622, %v1910
      %v1912 = vpop.f32.mrf.mxu0
      %1913 = vmatprep.mubr.bf16.mxu0 %v1047
      %1914 = vmatmul.mubr.bf16.gmra.mxu0 %v1046
      %v1915 = vpop.f32.mrf.mxu0
      %v1916 = vadd.f32 %v1627, %v1915
      %v1917 = vpop.f32.mrf.mxu0
      %v1918 = vpop.f32.mrf.mxu0
      %v1919 = vadd.f32 %v1630, %v1918
      %v1920 = vpop.f32.mrf.mxu0
      %1921 = vmatprep.mubr.bf16.mxu0 %v1051
      %1922 = vmatmul.mubr.bf16.gmra.mxu0 %v1050
      %v1923 = vpop.f32.mrf.mxu0
      %v1924 = vadd.f32 %v1635, %v1923
      %v1925 = vpop.f32.mrf.mxu0
      %v1926 = vpop.f32.mrf.mxu0
      %v1927 = vadd.f32 %v1638, %v1926
      %v1928 = vpop.f32.mrf.mxu0
      %1929 = vmatprep.mubr.bf16.mxu0 %v1055
      %1930 = vmatmul.mubr.bf16.gmra.mxu0 %v1054
      %v1931 = vpop.f32.mrf.mxu0
      %v1932 = vadd.f32 %v1643, %v1931
      %v1933 = vpop.f32.mrf.mxu0
      %v1934 = vpop.f32.mrf.mxu0
      %v1935 = vadd.f32 %v1646, %v1934
      %v1936 = vpop.f32.mrf.mxu0
      %1937 = vmatprep.mubr.bf16.mxu0 %v1059
      %1938 = vmatmul.mubr.bf16.gmra.mxu0 %v1058
      %v1939 = vpop.f32.mrf.mxu0
      %v1940 = vadd.f32 %v1651, %v1939
      %v1941 = vpop.f32.mrf.mxu0
      %v1942 = vpop.f32.mrf.mxu0
      %v1943 = vadd.f32 %v1654, %v1942
      %v1944 = vpop.f32.mrf.mxu0
      %1945 = vmatprep.mubr.bf16.mxu0 %v1063
      %1946 = vmatmul.mubr.bf16.gmra.mxu0 %v1062
      %v1947 = vpop.f32.mrf.mxu0
      %v1948 = vadd.f32 %v1659, %v1947
      %v1949 = vpop.f32.mrf.mxu0
      %v1950 = vpop.f32.mrf.mxu0
      %v1951 = vadd.f32 %v1662, %v1950
      %v1952 = vpop.f32.mrf.mxu0
      %1953 = vmatprep.mubr.bf16.mxu0 %v1067
      %1954 = vmatmul.mubr.bf16.gmra.mxu0 %v1066
      %v1955 = vpop.f32.mrf.mxu0
      %v1956 = vadd.f32 %v1667, %v1955
      %v1957 = vpop.f32.mrf.mxu0
      %v1958 = vpop.f32.mrf.mxu0
      %v1959 = vadd.f32 %v1670, %v1958
      %v1960 = vpop.f32.mrf.mxu0
      %1961 = vmatprep.mubr.bf16.mxu0 %v1071
      %1962 = vmatmul.mubr.bf16.gmra.mxu0 %v1070
      %v1963 = vpop.f32.mrf.mxu0
      %v1964 = vadd.f32 %v1675, %v1963
      %v1965 = vpop.f32.mrf.mxu0
      %v1966 = vpop.f32.mrf.mxu0
      %v1967 = vadd.f32 %v1678, %v1966
      %v1968 = vpop.f32.mrf.mxu0
      %1969 = vdwg.mxu0
      %v1970 = vadd.f32 %v304, %v1716
      %v1971 = vadd.f32 %v305, %v1719
      %v1972 = vadd.f32 %v306, %v1724
      %v1973 = vadd.f32 %v307, %v1727
      %v1974 = vadd.f32 %v308, %v1732
      %v1975 = vadd.f32 %v309, %v1735
      %v1976 = vadd.f32 %v310, %v1740
      %v1977 = vadd.f32 %v311, %v1743
      %v1978 = vadd.f32 %v312, %v1748
      %v1979 = vadd.f32 %v313, %v1751
      %v1980 = vadd.f32 %v314, %v1756
      %v1981 = vadd.f32 %v315, %v1759
      %v1982 = vadd.f32 %v316, %v1764
      %v1983 = vadd.f32 %v317, %v1767
      %v1984 = vadd.f32 %v318, %v1772
      %v1985 = vadd.f32 %v319, %v1775
      %v1986 = vadd.f32 %v320, %v1780
      %v1987 = vadd.f32 %v321, %v1783
      %v1988 = vadd.f32 %v322, %v1788
      %v1989 = vadd.f32 %v323, %v1791
      %v1990 = vadd.f32 %v324, %v1796
      %v1991 = vadd.f32 %v325, %v1799
      %v1992 = vadd.f32 %v326, %v1804
      %v1993 = vadd.f32 %v327, %v1807
      %v1994 = vadd.f32 %v328, %v1812
      %v1995 = vadd.f32 %v329, %v1815
      %v1996 = vadd.f32 %v330, %v1820
      %v1997 = vadd.f32 %v331, %v1823
      %v1998 = vadd.f32 %v332, %v1828
      %v1999 = vadd.f32 %v333, %v1831
      %v2000 = vadd.f32 %v334, %v1836
      %v2001 = vadd.f32 %v335, %v1839
      %v2002 = vadd.f32 %v336, %v1844
      %v2003 = vadd.f32 %v337, %v1847
      %v2004 = vadd.f32 %v338, %v1852
      %v2005 = vadd.f32 %v339, %v1855
      %v2006 = vadd.f32 %v340, %v1860
      %v2007 = vadd.f32 %v341, %v1863
      %v2008 = vadd.f32 %v342, %v1868
      %v2009 = vadd.f32 %v343, %v1871
      %v2010 = vadd.f32 %v344, %v1876
      %v2011 = vadd.f32 %v345, %v1879
      %v2012 = vadd.f32 %v346, %v1884
      %v2013 = vadd.f32 %v347, %v1887
      %v2014 = vadd.f32 %v348, %v1892
      %v2015 = vadd.f32 %v349, %v1895
      %v2016 = vadd.f32 %v350, %v1900
      %v2017 = vadd.f32 %v351, %v1903
      %v2018 = vadd.f32 %v352, %v1908
      %v2019 = vadd.f32 %v353, %v1911
      %v2020 = vadd.f32 %v354, %v1916
      %v2021 = vadd.f32 %v355, %v1919
      %v2022 = vadd.f32 %v356, %v1924
      %v2023 = vadd.f32 %v357, %v1927
      %v2024 = vadd.f32 %v358, %v1932
      %v2025 = vadd.f32 %v359, %v1935
      %v2026 = vadd.f32 %v360, %v1940
      %v2027 = vadd.f32 %v361, %v1943
      %v2028 = vadd.f32 %v362, %v1948
      %v2029 = vadd.f32 %v363, %v1951
      %v2030 = vadd.f32 %v364, %v1956
      %v2031 = vadd.f32 %v365, %v1959
      %v2032 = vadd.f32 %v366, %v1964
      %v2033 = vadd.f32 %v367, %v1967
      %vm2034 = vcmask 261120
      %2035 = vst.msk [vmem:[%s225] sm:$0xff] %vm2034, %v1970
      %2036 = vst.msk [vmem:[%s225 + $0x8] sm:$0xff] %vm2034, %v1971
      %2037 = vst.msk [vmem:[%s225 + $0x10] sm:$0xff] %vm2034, %v1972
      %2038 = vst.msk [vmem:[%s225 + $0x18] sm:$0xff] %vm2034, %v1973
      %2039 = vst.msk [vmem:[%s225 + $0x20] sm:$0xff] %vm2034, %v1974
      %2040 = vst.msk [vmem:[%s225 + $0x28] sm:$0xff] %vm2034, %v1975
      %2041 = vst.msk [vmem:[%s225 + $0x30] sm:$0xff] %vm2034, %v1976
      %2042 = vst.msk [vmem:[%s225 + $0x38] sm:$0xff] %vm2034, %v1977
      %2043 = vst.msk [vmem:[%s225 + $0x40] sm:$0xff] %vm2034, %v1978
      %2044 = vst.msk [vmem:[%s225 + $0x48] sm:$0xff] %vm2034, %v1979
      %2045 = vst.msk [vmem:[%s225 + $0x50] sm:$0xff] %vm2034, %v1980
      %2046 = vst.msk [vmem:[%s225 + $0x58] sm:$0xff] %vm2034, %v1981
      %2047 = vst.msk [vmem:[%s225 + $0x60] sm:$0xff] %vm2034, %v1982
      %2048 = vst.msk [vmem:[%s225 + $0x68] sm:$0xff] %vm2034, %v1983
      %2049 = vst.msk [vmem:[%s225 + $0x70] sm:$0xff] %vm2034, %v1984
      %2050 = vst.msk [vmem:[%s225 + $0x78] sm:$0xff] %vm2034, %v1985
      %2051 = vst.msk [vmem:[%s225 + $0x80] sm:$0xff] %vm2034, %v1986
      %2052 = vst.msk [vmem:[%s225 + $0x88] sm:$0xff] %vm2034, %v1987
      %2053 = vst.msk [vmem:[%s225 + $0x90] sm:$0xff] %vm2034, %v1988
      %2054 = vst.msk [vmem:[%s225 + $0x98] sm:$0xff] %vm2034, %v1989
      %2055 = vst.msk [vmem:[%s225 + $0xa0] sm:$0xff] %vm2034, %v1990
      %2056 = vst.msk [vmem:[%s225 + $0xa8] sm:$0xff] %vm2034, %v1991
      %2057 = vst.msk [vmem:[%s225 + $0xb0] sm:$0xff] %vm2034, %v1992
      %2058 = vst.msk [vmem:[%s225 + $0xb8] sm:$0xff] %vm2034, %v1993
      %2059 = vst.msk [vmem:[%s225 + $0xc0] sm:$0xff] %vm2034, %v1994
      %2060 = vst.msk [vmem:[%s225 + $0xc8] sm:$0xff] %vm2034, %v1995
      %2061 = vst.msk [vmem:[%s225 + $0xd0] sm:$0xff] %vm2034, %v1996
      %2062 = vst.msk [vmem:[%s225 + $0xd8] sm:$0xff] %vm2034, %v1997
      %2063 = vst.msk [vmem:[%s225 + $0xe0] sm:$0xff] %vm2034, %v1998
      %2064 = vst.msk [vmem:[%s225 + $0xe8] sm:$0xff] %vm2034, %v1999
      %2065 = vst.msk [vmem:[%s225 + $0xf0] sm:$0xff] %vm2034, %v2000
      %2066 = vst.msk [vmem:[%s225 + $0xf8] sm:$0xff] %vm2034, %v2001
      %2067 = vst.msk [vmem:[%s225 + $0x100] sm:$0xff] %vm2034, %v2002
      %2068 = vst.msk [vmem:[%s225 + $0x108] sm:$0xff] %vm2034, %v2003
      %2069 = vst.msk [vmem:[%s225 + $0x110] sm:$0xff] %vm2034, %v2004
      %2070 = vst.msk [vmem:[%s225 + $0x118] sm:$0xff] %vm2034, %v2005
      %2071 = vst.msk [vmem:[%s225 + $0x120] sm:$0xff] %vm2034, %v2006
      %2072 = vst.msk [vmem:[%s225 + $0x128] sm:$0xff] %vm2034, %v2007
      %2073 = vst.msk [vmem:[%s225 + $0x130] sm:$0xff] %vm2034, %v2008
      %2074 = vst.msk [vmem:[%s225 + $0x138] sm:$0xff] %vm2034, %v2009
      %2075 = vst.msk [vmem:[%s225 + $0x140] sm:$0xff] %vm2034, %v2010
      %2076 = vst.msk [vmem:[%s225 + $0x148] sm:$0xff] %vm2034, %v2011
      %2077 = vst.msk [vmem:[%s225 + $0x150] sm:$0xff] %vm2034, %v2012
      %2078 = vst.msk [vmem:[%s225 + $0x158] sm:$0xff] %vm2034, %v2013
      %2079 = vst.msk [vmem:[%s225 + $0x160] sm:$0xff] %vm2034, %v2014
      %2080 = vst.msk [vmem:[%s225 + $0x168] sm:$0xff] %vm2034, %v2015
      %2081 = vst.msk [vmem:[%s225 + $0x170] sm:$0xff] %vm2034, %v2016
      %2082 = vst.msk [vmem:[%s225 + $0x178] sm:$0xff] %vm2034, %v2017
      %2083 = vst.msk [vmem:[%s225 + $0x180] sm:$0xff] %vm2034, %v2018
      %2084 = vst.msk [vmem:[%s225 + $0x188] sm:$0xff] %vm2034, %v2019
      %2085 = vst.msk [vmem:[%s225 + $0x190] sm:$0xff] %vm2034, %v2020
      %2086 = vst.msk [vmem:[%s225 + $0x198] sm:$0xff] %vm2034, %v2021
      %2087 = vst.msk [vmem:[%s225 + $0x1a0] sm:$0xff] %vm2034, %v2022
      %2088 = vst.msk [vmem:[%s225 + $0x1a8] sm:$0xff] %vm2034, %v2023
      %2089 = vst.msk [vmem:[%s225 + $0x1b0] sm:$0xff] %vm2034, %v2024
      %2090 = vst.msk [vmem:[%s225 + $0x1b8] sm:$0xff] %vm2034, %v2025
      %2091 = vst.msk [vmem:[%s225 + $0x1c0] sm:$0xff] %vm2034, %v2026
      %2092 = vst.msk [vmem:[%s225 + $0x1c8] sm:$0xff] %vm2034, %v2027
      %2093 = vst.msk [vmem:[%s225 + $0x1d0] sm:$0xff] %vm2034, %v2028
      %2094 = vst.msk [vmem:[%s225 + $0x1d8] sm:$0xff] %vm2034, %v2029
      %2095 = vst.msk [vmem:[%s225 + $0x1e0] sm:$0xff] %vm2034, %v2030
      %2096 = vst.msk [vmem:[%s225 + $0x1e8] sm:$0xff] %vm2034, %v2031
      %2097 = vst.msk [vmem:[%s225 + $0x1f0] sm:$0xff] %vm2034, %v2032
      %2098 = vst.msk [vmem:[%s225 + $0x1f8] sm:$0xff] %vm2034, %v2033
      %s2099 = smul.u32 64, %s18
      %p2100 = scmp.lt.s32.totalorder %s2099, 127
      %s2101 = scalar_select %p2100, %s2099, 127
      %s2102 = smul.addr %s2101, 8
      %s2103 = scalar_lea.vmem %s3, %s2102
      // Predicated region
      $region37: #{_lambda_.1} parent=31 // pred_check
        %p2104 = pneg %p119
      $region38: #{_lambda_.1} parent=31 // pred_check_branch
        %2106 = sbr.rel (%p2104) target = $region40
      $region39: #{_lambda_.1} parent=31 // pred_region
        %s2107 = smul.u32 64, %s18
      $region40: #{_lambda_.1} parent=31 // pred_fallthru
        _
    $region32: #{_lambda_.1} parent=5 // pred_fallthru
      _
    %p2108 = scmp.le.s32.totalorder 2, %s9
    // Predicated region
    $region41: #{_lambda_.1} parent=5 // pred_check
      %p2109 = pneg %p2108
    $region42: #{_lambda_.1} parent=5 // pred_check_branch
      %2111 = sbr.rel (%p2109) target = $region44
    $region43: #{_lambda_.1} parent=5 // pred_region
      %s2112 = ssub.s32 %s9, 2
      // Predicated region
      $region45: #{_lambda_.1} parent=43 // pred_check
        %p2113 = pneg %p125
      $region46: #{_lambda_.1} parent=43 // pred_check_branch
        %2115 = sbr.rel (%p2113) target = $region48
      $region47: #{_lambda_.1} parent=43 // pred_region
        %s2116 = smul.u32 64, %s20
        %p2117 = scmp.lt.s32.totalorder %s2116, 127
        %s2118 = scalar_select %p2117, %s2116, 127
        %s2119 = smul.addr %s2118, 8
        %s2120 = scalar_lea.vmem %s3, %s2119
      $region48: #{_lambda_.1} parent=43 // pred_fallthru
        _
    $region44: #{_lambda_.1} parent=5 // pred_fallthru
      _
  $region6: #{_lambda_.1} parent=0 // loop_footer
    %s13 = sadd.s32 1, %s9
  $region7: #{_lambda_.1} parent=0 // loop_footer_branch
    %8 = sbr.rel target = $region3
  $region8: #{_lambda_.1} parent=0 // loop_exit
    _

</llo_original>
